<compile_context>
chip_gen: v5e
topology: v5e:2x2
jax: 0.10.0
libtpu: 0.0.40
codegen_flags: <defaults>
</compile_context>

<pallas_src>
import functools

import jax
import jax.numpy as jnp
import numpy as np
from jax.experimental import pallas as pl
from jax.experimental.pallas import tpu as pltpu

EPS = 1e-5
LANE = 128
SUBLANE = 8


def _round_up(x, m):
    return ((x + m - 1) // m) * m


def _pad2(a, rows, cols):
    r, c = a.shape
    return jnp.pad(a, ((0, rows - r), (0, cols - c)))


# ----------------------------- pass 1 kernels --------------------------------
# Tiled matmul with f32 accumulator scratch + per-M-tile partial BN statistics.
# grid = (grid_m, grid_k); K innermost ("arbitrary"), M "parallel".

def _stats_rows(y):
    """(sum, sum_sq) over rows of y packed into an (8, C) slab (rows 2..7 = 0)."""
    s = jnp.sum(y, axis=0, keepdims=True)
    ss = jnp.sum(y * y, axis=0, keepdims=True)
    pad = jnp.zeros((SUBLANE - 2, y.shape[1]), jnp.float32)
    return jnp.concatenate([s, ss, pad], axis=0)


def _mm_stats_kernel(p_ref, w_ref, y_ref, st_ref, acc_ref):
    k = pl.program_id(1)

    @pl.when(k == 0)
    def _zero_acc():
        acc_ref[...] = jnp.zeros_like(acc_ref)

    acc_ref[...] += jnp.dot(p_ref[...], w_ref[...],
                            preferred_element_type=jnp.float32)

    @pl.when(k == pl.num_programs(1) - 1)
    def _finalize():
        y = acc_ref[...]
        y_ref[...] = y
        st_ref[...] = _stats_rows(y)


def _mm_stats_ds_kernel(p_ref, w_ref, xd_ref, wd_ref,
                        y_ref, st_ref, std_ref, acc_ref):
    """Same as _mm_stats_kernel + stats of the fused 1x1 downsample matmul."""
    k = pl.program_id(1)

    @pl.when(k == 0)
    def _zero_acc():
        acc_ref[...] = jnp.zeros_like(acc_ref)

    acc_ref[...] += jnp.dot(p_ref[...], w_ref[...],
                            preferred_element_type=jnp.float32)

    @pl.when(k == pl.num_programs(1) - 1)
    def _finalize():
        y = acc_ref[...]
        y_ref[...] = y
        st_ref[...] = _stats_rows(y)
        yd = jnp.dot(xd_ref[...], wd_ref[...],
                     preferred_element_type=jnp.float32)
        std_ref[...] = _stats_rows(yd)


# ----------------------------- pass 2 kernels --------------------------------
# Per-M-tile normalization (+ residual) + ReLU using the reduced global stats.

def _bn_affine(st, g, b, inv_m):
    mean = st[0:1, :] * inv_m
    var = jnp.maximum(st[1:2, :] * inv_m - mean * mean, 0.0)  # biased var
    scale = g * jax.lax.rsqrt(var + EPS)
    shift = b - mean * scale
    return scale, shift


def _bn_act_kernel(y_ref, st_ref, g_ref, b_ref, o_ref, *, m, relu):
    scale, shift = _bn_affine(st_ref[...], g_ref[...], b_ref[...], 1.0 / m)
    out = y_ref[...] * scale + shift
    if relu:
        out = jnp.maximum(out, 0.0)
    o_ref[...] = out


def _bn_addres_relu_kernel(y_ref, st_ref, g_ref, b_ref, r_ref, o_ref, *, m):
    scale, shift = _bn_affine(st_ref[...], g_ref[...], b_ref[...], 1.0 / m)
    out = y_ref[...] * scale + shift + r_ref[...]
    o_ref[...] = jnp.maximum(out, 0.0)


def _bn_ds_addres_relu_kernel(y_ref, st_ref, g_ref, b_ref,
                              xd_ref, wd_ref, std_ref, gd_ref, bd_ref,
                              o_ref, *, m):
    inv_m = 1.0 / m
    sc2, sh2 = _bn_affine(st_ref[...], g_ref[...], b_ref[...], inv_m)
    scd, shd = _bn_affine(std_ref[...], gd_ref[...], bd_ref[...], inv_m)
    # tiny 1x1-downsample matmul recomputed here (K = Cin, rides in MXU slack)
    yd = jnp.dot(xd_ref[...], wd_ref[...], preferred_element_type=jnp.float32)
    out = (y_ref[...] * sc2 + sh2) + (yd * scd + shd)
    o_ref[...] = jnp.maximum(out, 0.0)


# --------------------------- layer wrapper ------------------------------------

def _conv_bn_layer(patches, w_mat, gamma, beta, *, m_rows, relu=True,
                   residual=None, downsample=None,
                   tm=512, tk=256, mxu_dtype=jnp.bfloat16,
                   vmem_limit_bytes=48 * 1024 * 1024):
    """conv (im2col matmul) + training-mode BN (+ fused residual) (+ ReLU).

    patches : [M, K] f32     w_mat : [K, Cout]     gamma/beta : [Cout]
    residual: optional [M, Cout] identity residual added before the final ReLU
    downsample: optional dict(x=[M, Cin], w=[Cin, Cout], gamma, beta) fused
                1x1-conv + BN residual path.
    Returns [M, Cout] f32.
    """
    M, K = patches.shape
    Cout = w_mat.shape[1]

    tm_eff = min(tm, _round_up(M, SUBLANE))
    Mp = _round_up(M, tm_eff)
    grid_m = Mp // tm_eff
    Kp0 = _round_up(K, LANE)
    tk_eff = min(tk, Kp0)
    Kp = _round_up(Kp0, tk_eff)
    grid_k = Kp // tk_eff
    Cp = _round_up(Cout, LANE)

    p = _pad2(patches.astype(mxu_dtype), Mp, Kp)
    w = _pad2(w_mat.astype(mxu_dtype), Kp, Cp)
    g = _pad2(gamma.astype(jnp.float32).reshape(1, -1), 1, Cp)
    b = _pad2(beta.astype(jnp.float32).reshape(1, -1), 1, Cp)

    cparams1 = pltpu.CompilerParams(
        dimension_semantics=("parallel", "arbitrary"),
        vmem_limit_bytes=vmem_limit_bytes)
    cparams2 = pltpu.CompilerParams(
        dimension_semantics=("parallel",),
        vmem_limit_bytes=vmem_limit_bytes)

    # ---- pass 1: tiled matmul + partial stats ----
    p_spec = pl.BlockSpec((tm_eff, tk_eff), lambda i, k: (i, k))
    w_spec = pl.BlockSpec((tk_eff, Cp), lambda i, k: (k, 0))
    y_spec = pl.BlockSpec((tm_eff, Cp), lambda i, k: (i, 0))
    st_spec = pl.BlockSpec((SUBLANE, Cp), lambda i, k: (i, 0))
    y_shape = jax.ShapeDtypeStruct((Mp, Cp), jnp.float32)
    st_shape = jax.ShapeDtypeStruct((grid_m * SUBLANE, Cp), jnp.float32)
    scratch = [pltpu.VMEM((tm_eff, Cp), jnp.float32)]

    if downsample is not None:
        Cin = downsample["x"].shape[1]
        Cinp = _round_up(Cin, LANE)
        xd = _pad2(downsample["x"].astype(mxu_dtype), Mp, Cinp)
        wd = _pad2(downsample["w"].astype(mxu_dtype), Cinp, Cp)
        gd = _pad2(downsample["gamma"].astype(jnp.float32).reshape(1, -1), 1, Cp)
        bd = _pad2(downsample["beta"].astype(jnp.float32).reshape(1, -1), 1, Cp)

        y_pad, st_p, std_p = pl.pallas_call(
            _mm_stats_ds_kernel,
            out_shape=(y_shape, st_shape, st_shape),
            grid_spec=pltpu.PrefetchScalarGridSpec(
                num_scalar_prefetch=0, grid=(grid_m, grid_k),
                in_specs=[p_spec, w_spec,
                          pl.BlockSpec((tm_eff, Cinp), lambda i, k: (i, 0)),
                          pl.BlockSpec((Cinp, Cp), lambda i, k: (0, 0))],
                out_specs=[y_spec, st_spec, st_spec],
                scratch_shapes=scratch),
            compiler_params=cparams1,
        )(p, w, xd, wd)
    else:
        y_pad, st_p = pl.pallas_call(
            _mm_stats_kernel,
            out_shape=(y_shape, st_shape),
            grid_spec=pltpu.PrefetchScalarGridSpec(
                num_scalar_prefetch=0, grid=(grid_m, grid_k),
                in_specs=[p_spec, w_spec],
                out_specs=[y_spec, st_spec],
                scratch_shapes=scratch),
            compiler_params=cparams1,
        )(p, w)

    # tiny cross-tile reduction of the partial statistics
    st = jnp.sum(st_p.reshape(grid_m, SUBLANE, Cp), axis=0)

    # ---- pass 2: normalize (+ residual) + ReLU ----
    y2_spec = pl.BlockSpec((tm_eff, Cp), lambda i: (i, 0))
    st2_spec = pl.BlockSpec((SUBLANE, Cp), lambda i: (0, 0))
    vec_spec = pl.BlockSpec((1, Cp), lambda i: (0, 0))
    out_spec = pl.BlockSpec((tm_eff, Cp), lambda i: (i, 0))
    out_shape = jax.ShapeDtypeStruct((Mp, Cp), jnp.float32)

    if downsample is not None:
        std = jnp.sum(std_p.reshape(grid_m, SUBLANE, Cp), axis=0)
        kern = functools.partial(_bn_ds_addres_relu_kernel, m=float(m_rows))
        out_pad = pl.pallas_call(
            kern,
            out_shape=out_shape,
            grid_spec=pltpu.PrefetchScalarGridSpec(
                num_scalar_prefetch=0, grid=(grid_m,),
                in_specs=[y2_spec, st2_spec, vec_spec, vec_spec,
                          pl.BlockSpec((tm_eff, Cinp), lambda i: (i, 0)),
                          pl.BlockSpec((Cinp, Cp), lambda i: (0, 0)),
                          st2_spec, vec_spec, vec_spec],
                out_specs=out_spec),
            compiler_params=cparams2,
        )(y_pad, st, g, b, xd, wd, std, gd, bd)
    elif residual is not None:
        r = _pad2(residual.astype(jnp.float32), Mp, Cp)
        kern = functools.partial(_bn_addres_relu_kernel, m=float(m_rows))
        out_pad = pl.pallas_call(
            kern,
            out_shape=out_shape,
            grid_spec=pltpu.PrefetchScalarGridSpec(
                num_scalar_prefetch=0, grid=(grid_m,),
                in_specs=[y2_spec, st2_spec, vec_spec, vec_spec, y2_spec],
                out_specs=out_spec),
            compiler_params=cparams2,
        )(y_pad, st, g, b, r)
    else:
        kern = functools.partial(_bn_act_kernel, m=float(m_rows), relu=relu)
        out_pad = pl.pallas_call(
            kern,
            out_shape=out_shape,
            grid_spec=pltpu.PrefetchScalarGridSpec(
                num_scalar_prefetch=0, grid=(grid_m,),
                in_specs=[y2_spec, st2_spec, vec_spec, vec_spec],
                out_specs=out_spec),
            compiler_params=cparams2,
        )(y_pad, st, g, b)

    return out_pad[:M, :Cout]


# ------------------------------- JAX glue -------------------------------------

def _im2col(x, ksize, stride, padding):
    """x: [N, H, W, C] -> ([N*Ho*Wo, k*k*C], Ho, Wo)."""
    N, H, W, C = x.shape
    xp = jnp.pad(x, ((0, 0), (padding, padding), (padding, padding), (0, 0)))
    Ho = (H + 2 * padding - ksize) // stride + 1
    Wo = (W + 2 * padding - ksize) // stride + 1
    cols = []
    for kh in range(ksize):
        for kw in range(ksize):
            cols.append(
                xp[:, kh:kh + (Ho - 1) * stride + 1:stride,
                      kw:kw + (Wo - 1) * stride + 1:stride, :])
    patches = jnp.concatenate(cols, axis=-1)
    return patches.reshape(N * Ho * Wo, ksize * ksize * C), Ho, Wo


def _oihw_to_mat(w):
    cout, cin, kh, kw = w.shape
    return jnp.transpose(w, (2, 3, 1, 0)).reshape(kh * kw * cin, cout)


def prepare_params(params):
    """Hoist weight layout conversion (OIHW -> [K, Cout]) out of the fwd path."""
    prep = {
        "conv1_w": _oihw_to_mat(params["conv1_w"]),
        "bn1_g": params["bn1_g"], "bn1_b": params["bn1_b"],
        "conv2_w": _oihw_to_mat(params["conv2_w"]),
        "bn2_g": params["bn2_g"], "bn2_b": params["bn2_b"],
    }
    if "down_w" in params:
        prep["down_w"] = _oihw_to_mat(params["down_w"])
        prep["bnd_g"] = params["bnd_g"]
        prep["bnd_b"] = params["bnd_b"]
    return prep


@functools.partial(jax.jit, static_argnums=2)
def basic_block_forward(x_nchw, prep, stride):
    x = jnp.transpose(x_nchw, (0, 2, 3, 1)).astype(jnp.float32)  # NHWC
    N, H, W, Cin = x.shape
    planes = prep["conv1_w"].shape[1]

    # conv1 (3x3, stride s, pad 1) -> bn1 -> relu
    p1, Ho, Wo = _im2col(x, 3, stride, 1)
    M = N * Ho * Wo
    out1 = _conv_bn_layer(p1, prep["conv1_w"], prep["bn1_g"], prep["bn1_b"],
                          m_rows=M, relu=True)
    out1_img = out1.reshape(N, Ho, Wo, planes)

    # conv2 (3x3, stride 1, pad 1) -> bn2 -> (+residual) -> relu
    p2, _, _ = _im2col(out1_img, 3, 1, 1)

    if stride != 1 or Cin != planes:
        # downsample residual = BN(1x1 strided conv(x)), fused into conv2 kernels
        xd = x[:, ::stride, ::stride, :].reshape(M, Cin)
        out = _conv_bn_layer(
            p2, prep["conv2_w"], prep["bn2_g"], prep["bn2_b"], m_rows=M,
            downsample=dict(x=xd, w=prep["down_w"],
                            gamma=prep["bnd_g"], beta=prep["bnd_b"]))
    else:
        out = _conv_bn_layer(
            p2, prep["conv2_w"], prep["bn2_g"], prep["bn2_b"], m_rows=M,
            residual=x.reshape(M, Cin))

    return jnp.transpose(out.reshape(N, Ho, Wo, planes), (0, 3, 1, 2))


# --------------------------- pure-JAX reference --------------------------------

def _ref_forward(x, params, stride, conv_dtype=jnp.float32):
    precision = (jax.lax.Precision.HIGHEST if conv_dtype == jnp.float32
                 else jax.lax.Precision.DEFAULT)

    def conv(x_, w, s, pad):
        return jax.lax.conv_general_dilated(
            x_.astype(conv_dtype), w.astype(conv_dtype),
            window_strides=(s, s), padding=[(pad, pad), (pad, pad)],
            dimension_numbers=("NCHW", "OIHW", "NCHW"),
            precision=precision, preferred_element_type=jnp.float32)

    def bn(y, g, b):
        mean = jnp.mean(y, axis=(0, 2, 3), keepdims=True)
        var = jnp.mean((y - mean) ** 2, axis=(0, 2, 3), keepdims=True)
        return ((y - mean) * jax.lax.rsqrt(var + EPS) * g.reshape(1, -1, 1, 1)
                + b.reshape(1, -1, 1, 1))

    out = jax.nn.relu(bn(conv(x, params["conv1_w"], stride, 1),
                         params["bn1_g"], params["bn1_b"]))
    out = bn(conv(out, params["conv2_w"], 1, 1),
             params["bn2_g"], params["bn2_b"])
    Cin, planes = x.shape[1], params["conv1_w"].shape[0]
    if stride != 1 or Cin != planes:
        sc = bn(conv(x, params["down_w"], stride, 0),
                params["bnd_g"], params["bnd_b"])
    else:
        sc = x
    return jax.nn.relu(out + sc)


# ----------------------------------- main --------------------------------------

def _make_params(key, in_planes, planes, with_downsample):
    ks = jax.random.split(key, 9)
    params = {
        "conv1_w": 0.1 * jax.random.normal(ks[0], (planes, in_planes, 3, 3), jnp.float32),
        "bn1_g": 1.0 + 0.1 * jax.random.normal(ks[1], (planes,), jnp.float32),
        "bn1_b": 0.1 * jax.random.normal(ks[2], (planes,), jnp.float32),
        "conv2_w": 0.1 * jax.random.normal(ks[3], (planes, planes, 3, 3), jnp.float32),
        "bn2_g": 1.0 + 0.1 * jax.random.normal(ks[4], (planes,), jnp.float32),
        "bn2_b": 0.1 * jax.random.normal(ks[5], (planes,), jnp.float32),
    }
    if with_downsample:
        params["down_w"] = 0.1 * jax.random.normal(ks[6], (planes, in_planes, 1, 1), jnp.float32)
        params["bnd_g"] = 1.0 + 0.1 * jax.random.normal(ks[7], (planes,), jnp.float32)
        params["bnd_b"] = 0.1 * jax.random.normal(ks[8], (planes,), jnp.float32)
    return params


def _run_case(key, N, in_planes, planes, H, W, stride):
    kx, kp = jax.random.split(key)
    x = jax.random.normal(kx, (N, in_planes, H, W), jnp.float32)
    need_ds = (stride != 1) or (in_planes != planes)
    params = _make_params(kp, in_planes, planes, need_ds)
    prep = prepare_params(params)

    out = jax.block_until_ready(basic_block_forward(x, prep, stride))
    Ho = (H - 1) // stride + 1
    Wo = (W - 1) // stride + 1
    assert out.shape == (N, planes, Ho, Wo)

    # Reference matched to the kernel's MXU precision (bf16 operands, f32 acc).
    ref_bf16 = jax.block_until_ready(
        _ref_forward(x, params, stride, conv_dtype=jnp.bfloat16))
    np.testing.assert_allclose(np.asarray(out), np.asarray(ref_bf16),
                               atol=1e-2, rtol=1e-2)
    # Full-f32 module reference (looser: kernel feeds the MXU bf16 operands).
    ref_f32 = jax.block_until_ready(
        _ref_forward(x, params, stride, conv_dtype=jnp.float32))
    np.testing.assert_allclose(np.asarray(out), np.asarray(ref_f32),
                               atol=5e-2, rtol=5e-2)


if __name__ == "__main__":
    key = jax.random.PRNGKey(0)
    k1, k2 = jax.random.split(key)
    # stride-2 block with 1x1-conv downsample (fused-residual kernel path)
    _run_case(k1, N=2, in_planes=4, planes=8, H=16, W=16, stride=2)
    # stride-1 identity-residual block
    _run_case(k2, N=2, in_planes=8, planes=8, H=16, W=16, stride=1)
    print("KERNEL_OK")
</pallas_src>

<mosaic_0001>
module attributes {stable_mosaic.version = 11 : i64} {
  func.func @_mm_stats_kernel(%arg0: i32, %arg1: i32, %arg2: memref<128x128xbf16, #tpu.memory_space<vmem>>, %arg3: memref<128x128xbf16, #tpu.memory_space<vmem>>, %arg4: memref<128x128xf32, #tpu.memory_space<vmem>>, %arg5: memref<8x128xf32, #tpu.memory_space<vmem>>, %arg6: memref<128x128xf32, #tpu.memory_space<vmem>>) attributes {dimension_semantics = [#tpu.dimension_semantics<parallel>, #tpu.dimension_semantics<arbitrary>], iteration_bounds = array<i64: 1, 1>, scalar_prefetch = 0 : i64, scratch_operands = 1 : i64, tpu.core_type = #tpu.core_type<tc>, window_params = [{transform_indices = @transform_0, window_bounds = array<i64: 128, 128>}, {transform_indices = @transform_1, window_bounds = array<i64: 128, 128>}, {transform_indices = @transform_2, window_bounds = array<i64: 128, 128>}, {transform_indices = @transform_3, window_bounds = array<i64: 8, 128>}]} {
    %c0_i32 = arith.constant 0 : i32
    %0 = arith.cmpi eq, %arg1, %c0_i32 : i32
    %1 = arith.extui %0 : i1 to i32
    %c0_i32_0 = arith.constant 0 : i32
    %2 = arith.cmpi ne, %1, %c0_i32_0 : i32
    scf.if %2 {
      %cst_10 = arith.constant 0.000000e+00 : f32
      %12 = vector.broadcast %cst_10 : f32 to vector<128x128xf32>
      %c0_11 = arith.constant 0 : index
      %c0_12 = arith.constant 0 : index
      %13 = vector.load %arg6[%c0_11, %c0_12] : memref<128x128xf32, #tpu.memory_space<vmem>>, vector<128x128xf32>
      tpu.vector_store %arg6[%c0_11, %c0_12], %12 {strides = array<i32>} : memref<128x128xf32, #tpu.memory_space<vmem>>, vector<128x128xf32>,
    } else {
    }
    %c0 = arith.constant 0 : index
    %c0_1 = arith.constant 0 : index
    %3 = vector.load %arg6[%c0, %c0_1] : memref<128x128xf32, #tpu.memory_space<vmem>>, vector<128x128xf32>
    %c0_2 = arith.constant 0 : index
    %c0_3 = arith.constant 0 : index
    %4 = vector.load %arg2[%c0_2, %c0_3] : memref<128x128xbf16, #tpu.memory_space<vmem>>, vector<128x128xbf16>
    %c0_4 = arith.constant 0 : index
    %c0_5 = arith.constant 0 : index
    %5 = vector.load %arg3[%c0_4, %c0_5] : memref<128x128xbf16, #tpu.memory_space<vmem>>, vector<128x128xbf16>
    %cst = arith.constant dense<0.000000e+00> : vector<128x128xf32>
    %6 = tpu.matmul %4, %5, %cst {dimension_numbers = #tpu.dot_dimension_numbers<[1], [0], [0], [1], [0, 0, 1, 1], [], []>} : vector<128x128xbf16>, vector<128x128xbf16>, vector<128x128xf32> -> vector<128x128xf32>
    %7 = arith.addf %3, %6 : vector<128x128xf32>
    %c0_6 = arith.constant 0 : index
    %c0_7 = arith.constant 0 : index
    %8 = vector.load %arg6[%c0_6, %c0_7] : memref<128x128xf32, #tpu.memory_space<vmem>>, vector<128x128xf32>
    tpu.vector_store %arg6[%c0_6, %c0_7], %7 {strides = array<i32>} : memref<128x128xf32, #tpu.memory_space<vmem>>, vector<128x128xf32>,
    %c0_i32_8 = arith.constant 0 : i32
    %9 = arith.cmpi eq, %arg1, %c0_i32_8 : i32
    %10 = arith.extui %9 : i1 to i32
    %c0_i32_9 = arith.constant 0 : i32
    %11 = arith.cmpi ne, %10, %c0_i32_9 : i32
    scf.if %11 {
      %c0_10 = arith.constant 0 : index
      %c0_11 = arith.constant 0 : index
      %12 = vector.load %arg6[%c0_10, %c0_11] : memref<128x128xf32, #tpu.memory_space<vmem>>, vector<128x128xf32>
      %c0_12 = arith.constant 0 : index
      %c0_13 = arith.constant 0 : index
      %13 = vector.load %arg4[%c0_12, %c0_13] : memref<128x128xf32, #tpu.memory_space<vmem>>, vector<128x128xf32>
      tpu.vector_store %arg4[%c0_12, %c0_13], %12 {strides = array<i32>} : memref<128x128xf32, #tpu.memory_space<vmem>>, vector<128x128xf32>,
      %cst_14 = arith.constant dense<0.000000e+00> : vector<128xf32>
      %14 = vector.multi_reduction <add>, %12, %cst_14 [0] : vector<128x128xf32> to vector<128xf32>
      %15 = vector.shape_cast %14 : vector<128xf32> to vector<1x128xf32>
      %16 = arith.mulf %12, %12 : vector<128x128xf32>
      %cst_15 = arith.constant dense<0.000000e+00> : vector<128xf32>
      %17 = vector.multi_reduction <add>, %16, %cst_15 [0] : vector<128x128xf32> to vector<128xf32>
      %18 = vector.shape_cast %17 : vector<128xf32> to vector<1x128xf32>
      %cst_16 = arith.constant 0.000000e+00 : f32
      %19 = vector.broadcast %cst_16 : f32 to vector<6x128xf32>
      %20 = tpu.concatenate %15, %18, %19 in 0 : vector<1x128xf32>, vector<1x128xf32>, vector<6x128xf32> -> vector<8x128xf32>
      %c0_17 = arith.constant 0 : index
      %c0_18 = arith.constant 0 : index
      %21 = vector.load %arg5[%c0_17, %c0_18] : memref<8x128xf32, #tpu.memory_space<vmem>>, vector<8x128xf32>
      tpu.vector_store %arg5[%c0_17, %c0_18], %20 {strides = array<i32>} : memref<8x128xf32, #tpu.memory_space<vmem>>, vector<8x128xf32>,
    } else {
    }
    return
  }
  func.func @transform_0(%arg0: i32, %arg1: i32) -> (i32, i32) {
    %c0_i32 = arith.constant 0 : i32
    return %arg0, %arg1 : i32, i32
  }
  func.func @transform_1(%arg0: i32, %arg1: i32) -> (i32, i32) {
    %c0_i32 = arith.constant 0 : i32
    %c0_i32_0 = arith.constant 0 : i32
    return %arg1, %c0_i32 : i32, i32
  }
  func.func @transform_2(%arg0: i32, %arg1: i32) -> (i32, i32) {
    %c0_i32 = arith.constant 0 : i32
    %c0_i32_0 = arith.constant 0 : i32
    return %arg0, %c0_i32 : i32, i32
  }
  func.func @transform_3(%arg0: i32, %arg1: i32) -> (i32, i32) {
    %c0_i32 = arith.constant 0 : i32
    %c0_i32_0 = arith.constant 0 : i32
    return %arg0, %c0_i32 : i32, i32
  }
}

module attributes {stable_mosaic.version = 11 : i64} {
  func.func @_bn_act_kernel(%arg0: i32, %arg1: memref<128x128xf32, #tpu.memory_space<vmem>>, %arg2: memref<8x128xf32, #tpu.memory_space<vmem>>, %arg3: memref<1x128xf32, #tpu.memory_space<vmem>>, %arg4: memref<1x128xf32, #tpu.memory_space<vmem>>, %arg5: memref<128x128xf32, #tpu.memory_space<vmem>>) attributes {dimension_semantics = [#tpu.dimension_semantics<parallel>], iteration_bounds = array<i64: 1>, scalar_prefetch = 0 : i64, scratch_operands = 0 : i64, tpu.core_type = #tpu.core_type<tc>, window_params = [{transform_indices = @transform_0, window_bounds = array<i64: 128, 128>}, {pipeline_mode = #tpu.pipeline_mode<synchronous>, transform_indices = @transform_1, window_bounds = array<i64: 8, 128>}, {pipeline_mode = #tpu.pipeline_mode<synchronous>, transform_indices = @transform_2, window_bounds = array<i64: 1, 128>}, {pipeline_mode = #tpu.pipeline_mode<synchronous>, transform_indices = @transform_3, window_bounds = array<i64: 1, 128>}, {transform_indices = @transform_4, window_bounds = array<i64: 128, 128>}]} {
    %c0 = arith.constant 0 : index
    %c0_0 = arith.constant 0 : index
    %0 = vector.load %arg2[%c0, %c0_0] : memref<8x128xf32, #tpu.memory_space<vmem>>, vector<8x128xf32>
    %c0_1 = arith.constant 0 : index
    %c0_2 = arith.constant 0 : index
    %1 = vector.load %arg3[%c0_1, %c0_2] : memref<1x128xf32, #tpu.memory_space<vmem>>, vector<1x128xf32>
    %c0_3 = arith.constant 0 : index
    %c0_4 = arith.constant 0 : index
    %2 = vector.load %arg4[%c0_3, %c0_4] : memref<1x128xf32, #tpu.memory_space<vmem>>, vector<1x128xf32>
    %3 = vector.extract_strided_slice %0 {offsets = [0, 0], sizes = [1, 128], strides = [1, 1]} : vector<8x128xf32> to vector<1x128xf32>
    %cst = arith.constant 7.812500e-03 : f32
    %4 = vector.broadcast %cst : f32 to vector<1x128xf32>
    %5 = arith.mulf %3, %4 : vector<1x128xf32>
    %6 = vector.extract_strided_slice %0 {offsets = [1, 0], sizes = [1, 128], strides = [1, 1]} : vector<8x128xf32> to vector<1x128xf32>
    %cst_5 = arith.constant 7.812500e-03 : f32
    %7 = vector.broadcast %cst_5 : f32 to vector<1x128xf32>
    %8 = arith.mulf %6, %7 : vector<1x128xf32>
    %9 = arith.mulf %5, %5 : vector<1x128xf32>
    %10 = arith.subf %8, %9 : vector<1x128xf32>
    %cst_6 = arith.constant 0.000000e+00 : f32
    %11 = vector.broadcast %cst_6 : f32 to vector<1x128xf32>
    %12 = arith.maximumf %10, %11 : vector<1x128xf32>
    %cst_7 = arith.constant 9.99999974E-6 : f32
    %13 = vector.broadcast %cst_7 : f32 to vector<1x128xf32>
    %14 = arith.addf %12, %13 : vector<1x128xf32>
    %15 = math.rsqrt %14 : vector<1x128xf32>
    %16 = arith.mulf %1, %15 : vector<1x128xf32>
    %17 = arith.mulf %5, %16 : vector<1x128xf32>
    %18 = arith.subf %2, %17 : vector<1x128xf32>
    %c0_8 = arith.constant 0 : index
    %c0_9 = arith.constant 0 : index
    %19 = vector.load %arg1[%c0_8, %c0_9] : memref<128x128xf32, #tpu.memory_space<vmem>>, vector<128x128xf32>
    %20 = vector.broadcast %16 : vector<1x128xf32> to vector<128x128xf32>
    %21 = arith.mulf %19, %20 : vector<128x128xf32>
    %22 = vector.broadcast %18 : vector<1x128xf32> to vector<128x128xf32>
    %23 = arith.addf %21, %22 : vector<128x128xf32>
    %cst_10 = arith.constant 0.000000e+00 : f32
    %24 = vector.broadcast %cst_10 : f32 to vector<128x128xf32>
    %25 = arith.maximumf %23, %24 : vector<128x128xf32>
    %c0_11 = arith.constant 0 : index
    %c0_12 = arith.constant 0 : index
    %26 = vector.load %arg5[%c0_11, %c0_12] : memref<128x128xf32, #tpu.memory_space<vmem>>, vector<128x128xf32>
    tpu.vector_store %arg5[%c0_11, %c0_12], %25 {strides = array<i32>} : memref<128x128xf32, #tpu.memory_space<vmem>>, vector<128x128xf32>,
    return
  }
  func.func @transform_0(%arg0: i32) -> (i32, i32) {
    %c0_i32 = arith.constant 0 : i32
    %c0_i32_0 = arith.constant 0 : i32
    return %arg0, %c0_i32 : i32, i32
  }
  func.func @transform_1(%arg0: i32) -> (i32, i32) {
    %c0_i32 = arith.constant 0 : i32
    %c0_i32_0 = arith.constant 0 : i32
    %c0_i32_1 = arith.constant 0 : i32
    return %c0_i32, %c0_i32_0 : i32, i32
  }
  func.func @transform_2(%arg0: i32) -> (i32, i32) {
    %c0_i32 = arith.constant 0 : i32
    %c0_i32_0 = arith.constant 0 : i32
    %c0_i32_1 = arith.constant 0 : i32
    return %c0_i32, %c0_i32_0 : i32, i32
  }
  func.func @transform_3(%arg0: i32) -> (i32, i32) {
    %c0_i32 = arith.constant 0 : i32
    %c0_i32_0 = arith.constant 0 : i32
    %c0_i32_1 = arith.constant 0 : i32
    return %c0_i32, %c0_i32_0 : i32, i32
  }
  func.func @transform_4(%arg0: i32) -> (i32, i32) {
    %c0_i32 = arith.constant 0 : i32
    %c0_i32_0 = arith.constant 0 : i32
    return %arg0, %c0_i32 : i32, i32
  }
}

module attributes {stable_mosaic.version = 11 : i64} {
  func.func @_bn_ds_addres_relu_kernel(%arg0: i32, %arg1: memref<128x128xf32, #tpu.memory_space<vmem>>, %arg2: memref<8x128xf32, #tpu.memory_space<vmem>>, %arg3: memref<1x128xf32, #tpu.memory_space<vmem>>, %arg4: memref<1x128xf32, #tpu.memory_space<vmem>>, %arg5: memref<128x128xbf16, #tpu.memory_space<vmem>>, %arg6: memref<128x128xbf16, #tpu.memory_space<vmem>>, %arg7: memref<8x128xf32, #tpu.memory_space<vmem>>, %arg8: memref<1x128xf32, #tpu.memory_space<vmem>>, %arg9: memref<1x128xf32, #tpu.memory_space<vmem>>, %arg10: memref<128x128xf32, #tpu.memory_space<vmem>>) attributes {dimension_semantics = [#tpu.dimension_semantics<parallel>], iteration_bounds = array<i64: 1>, scalar_prefetch = 0 : i64, scratch_operands = 0 : i64, tpu.core_type = #tpu.core_type<tc>, window_params = [{transform_indices = @transform_0, window_bounds = array<i64: 128, 128>}, {pipeline_mode = #tpu.pipeline_mode<synchronous>, transform_indices = @transform_1, window_bounds = array<i64: 8, 128>}, {pipeline_mode = #tpu.pipeline_mode<synchronous>, transform_indices = @transform_2, window_bounds = array<i64: 1, 128>}, {pipeline_mode = #tpu.pipeline_mode<synchronous>, transform_indices = @transform_3, window_bounds = array<i64: 1, 128>}, {transform_indices = @transform_4, window_bounds = array<i64: 128, 128>}, {pipeline_mode = #tpu.pipeline_mode<synchronous>, transform_indices = @transform_5, window_bounds = array<i64: 128, 128>}, {pipeline_mode = #tpu.pipeline_mode<synchronous>, transform_indices = @transform_6, window_bounds = array<i64: 8, 128>}, {pipeline_mode = #tpu.pipeline_mode<synchronous>, transform_indices = @transform_7, window_bounds = array<i64: 1, 128>}, {pipeline_mode = #tpu.pipeline_mode<synchronous>, transform_indices = @transform_8, window_bounds = array<i64: 1, 128>}, {transform_indices = @transform_9, window_bounds = array<i64: 128, 128>}]} {
    %c0 = arith.constant 0 : index
    %c0_0 = arith.constant 0 : index
    %0 = vector.load %arg2[%c0, %c0_0] : memref<8x128xf32, #tpu.memory_space<vmem>>, vector<8x128xf32>
    %c0_1 = arith.constant 0 : index
    %c0_2 = arith.constant 0 : index
    %1 = vector.load %arg3[%c0_1, %c0_2] : memref<1x128xf32, #tpu.memory_space<vmem>>, vector<1x128xf32>
    %c0_3 = arith.constant 0 : index
    %c0_4 = arith.constant 0 : index
    %2 = vector.load %arg4[%c0_3, %c0_4] : memref<1x128xf32, #tpu.memory_space<vmem>>, vector<1x128xf32>
    %3 = vector.extract_strided_slice %0 {offsets = [0, 0], sizes = [1, 128], strides = [1, 1]} : vector<8x128xf32> to vector<1x128xf32>
    %cst = arith.constant 7.812500e-03 : f32
    %4 = vector.broadcast %cst : f32 to vector<1x128xf32>
    %5 = arith.mulf %3, %4 : vector<1x128xf32>
    %6 = vector.extract_strided_slice %0 {offsets = [1, 0], sizes = [1, 128], strides = [1, 1]} : vector<8x128xf32> to vector<1x128xf32>
    %cst_5 = arith.constant 7.812500e-03 : f32
    %7 = vector.broadcast %cst_5 : f32 to vector<1x128xf32>
    %8 = arith.mulf %6, %7 : vector<1x128xf32>
    %9 = arith.mulf %5, %5 : vector<1x128xf32>
    %10 = arith.subf %8, %9 : vector<1x128xf32>
    %cst_6 = arith.constant 0.000000e+00 : f32
    %11 = vector.broadcast %cst_6 : f32 to vector<1x128xf32>
    %12 = arith.maximumf %10, %11 : vector<1x128xf32>
    %cst_7 = arith.constant 9.99999974E-6 : f32
    %13 = vector.broadcast %cst_7 : f32 to vector<1x128xf32>
    %14 = arith.addf %12, %13 : vector<1x128xf32>
    %15 = math.rsqrt %14 : vector<1x128xf32>
    %16 = arith.mulf %1, %15 : vector<1x128xf32>
    %17 = arith.mulf %5, %16 : vector<1x128xf32>
    %18 = arith.subf %2, %17 : vector<1x128xf32>
    %c0_8 = arith.constant 0 : index
    %c0_9 = arith.constant 0 : index
    %19 = vector.load %arg7[%c0_8, %c0_9] : memref<8x128xf32, #tpu.memory_space<vmem>>, vector<8x128xf32>
    %c0_10 = arith.constant 0 : index
    %c0_11 = arith.constant 0 : index
    %20 = vector.load %arg8[%c0_10, %c0_11] : memref<1x128xf32, #tpu.memory_space<vmem>>, vector<1x128xf32>
    %c0_12 = arith.constant 0 : index
    %c0_13 = arith.constant 0 : index
    %21 = vector.load %arg9[%c0_12, %c0_13] : memref<1x128xf32, #tpu.memory_space<vmem>>, vector<1x128xf32>
    %22 = vector.extract_strided_slice %19 {offsets = [0, 0], sizes = [1, 128], strides = [1, 1]} : vector<8x128xf32> to vector<1x128xf32>
    %cst_14 = arith.constant 7.812500e-03 : f32
    %23 = vector.broadcast %cst_14 : f32 to vector<1x128xf32>
    %24 = arith.mulf %22, %23 : vector<1x128xf32>
    %25 = vector.extract_strided_slice %19 {offsets = [1, 0], sizes = [1, 128], strides = [1, 1]} : vector<8x128xf32> to vector<1x128xf32>
    %cst_15 = arith.constant 7.812500e-03 : f32
    %26 = vector.broadcast %cst_15 : f32 to vector<1x128xf32>
    %27 = arith.mulf %25, %26 : vector<1x128xf32>
    %28 = arith.mulf %24, %24 : vector<1x128xf32>
    %29 = arith.subf %27, %28 : vector<1x128xf32>
    %cst_16 = arith.constant 0.000000e+00 : f32
    %30 = vector.broadcast %cst_16 : f32 to vector<1x128xf32>
    %31 = arith.maximumf %29, %30 : vector<1x128xf32>
    %cst_17 = arith.constant 9.99999974E-6 : f32
    %32 = vector.broadcast %cst_17 : f32 to vector<1x128xf32>
    %33 = arith.addf %31, %32 : vector<1x128xf32>
    %34 = math.rsqrt %33 : vector<1x128xf32>
    %35 = arith.mulf %20, %34 : vector<1x128xf32>
    %36 = arith.mulf %24, %35 : vector<1x128xf32>
    %37 = arith.subf %21, %36 : vector<1x128xf32>
    %c0_18 = arith.constant 0 : index
    %c0_19 = arith.constant 0 : index
    %38 = vector.load %arg5[%c0_18, %c0_19] : memref<128x128xbf16, #tpu.memory_space<vmem>>, vector<128x128xbf16>
    %c0_20 = arith.constant 0 : index
    %c0_21 = arith.constant 0 : index
    %39 = vector.load %arg6[%c0_20, %c0_21] : memref<128x128xbf16, #tpu.memory_space<vmem>>, vector<128x128xbf16>
    %cst_22 = arith.constant dense<0.000000e+00> : vector<128x128xf32>
    %40 = tpu.matmul %38, %39, %cst_22 {dimension_numbers = #tpu.dot_dimension_numbers<[1], [0], [0], [1], [0, 0, 1, 1], [], []>} : vector<128x128xbf16>, vector<128x128xbf16>, vector<128x128xf32> -> vector<128x128xf32>
    %c0_23 = arith.constant 0 : index
    %c0_24 = arith.constant 0 : index
    %41 = vector.load %arg1[%c0_23, %c0_24] : memref<128x128xf32, #tpu.memory_space<vmem>>, vector<128x128xf32>
    %42 = vector.broadcast %16 : vector<1x128xf32> to vector<128x128xf32>
    %43 = arith.mulf %41, %42 : vector<128x128xf32>
    %44 = vector.broadcast %18 : vector<1x128xf32> to vector<128x128xf32>
    %45 = arith.addf %43, %44 : vector<128x128xf32>
    %46 = vector.broadcast %35 : vector<1x128xf32> to vector<128x128xf32>
    %47 = arith.mulf %40, %46 : vector<128x128xf32>
    %48 = vector.broadcast %37 : vector<1x128xf32> to vector<128x128xf32>
    %49 = arith.addf %47, %48 : vector<128x128xf32>
    %50 = arith.addf %45, %49 : vector<128x128xf32>
    %cst_25 = arith.constant 0.000000e+00 : f32
    %51 = vector.broadcast %cst_25 : f32 to vector<128x128xf32>
    %52 = arith.maximumf %50, %51 : vector<128x128xf32>
    %c0_26 = arith.constant 0 : index
    %c0_27 = arith.constant 0 : index
    %53 = vector.load %arg10[%c0_26, %c0_27] : memref<128x128xf32, #tpu.memory_space<vmem>>, vector<128x128xf32>
    tpu.vector_store %arg10[%c0_26, %c0_27], %52 {strides = array<i32>} : memref<128x128xf32, #tpu.memory_space<vmem>>, vector<128x128xf32>,
    return
  }
  func.func @transform_0(%arg0: i32) -> (i32, i32) {
    %c0_i32 = arith.constant 0 : i32
    %c0_i32_0 = arith.constant 0 : i32
    return %arg0, %c0_i32 : i32, i32
  }
  func.func @transform_1(%arg0: i32) -> (i32, i32) {
    %c0_i32 = arith.constant 0 : i32
    %c0_i32_0 = arith.constant 0 : i32
    %c0_i32_1 = arith.constant 0 : i32
    return %c0_i32, %c0_i32_0 : i32, i32
  }
  func.func @transform_2(%arg0: i32) -> (i32, i32) {
    %c0_i32 = arith.constant 0 : i32
    %c0_i32_0 = arith.constant 0 : i32
    %c0_i32_1 = arith.constant 0 : i32
    return %c0_i32, %c0_i32_0 : i32, i32
  }
  func.func @transform_3(%arg0: i32) -> (i32, i32) {
    %c0_i32 = arith.constant 0 : i32
    %c0_i32_0 = arith.constant 0 : i32
    %c0_i32_1 = arith.constant 0 : i32
    return %c0_i32, %c0_i32_0 : i32, i32
  }
  func.func @transform_4(%arg0: i32) -> (i32, i32) {
    %c0_i32 = arith.constant 0 : i32
    %c0_i32_0 = arith.constant 0 : i32
    return %arg0, %c0_i32 : i32, i32
  }
  func.func @transform_5(%arg0: i32) -> (i32, i32) {
    %c0_i32 = arith.constant 0 : i32
    %c0_i32_0 = arith.constant 0 : i32
    %c0_i32_1 = arith.constant 0 : i32
    return %c0_i32, %c0_i32_0 : i32, i32
  }
  func.func @transform_6(%arg0: i32) -> (i32, i32) {
    %c0_i32 = arith.constant 0 : i32
    %c0_i32_0 = arith.constant 0 : i32
    %c0_i32_1 = arith.constant 0 : i32
    return %c0_i32, %c0_i32_0 : i32, i32
  }
  func.func @transform_7(%arg0: i32) -> (i32, i32) {
    %c0_i32 = arith.constant 0 : i32
    %c0_i32_0 = arith.constant 0 : i32
    %c0_i32_1 = arith.constant 0 : i32
    return %c0_i32, %c0_i32_0 : i32, i32
  }
  func.func @transform_8(%arg0: i32) -> (i32, i32) {
    %c0_i32 = arith.constant 0 : i32
    %c0_i32_0 = arith.constant 0 : i32
    %c0_i32_1 = arith.constant 0 : i32
    return %c0_i32, %c0_i32_0 : i32, i32
  }
  func.func @transform_9(%arg0: i32) -> (i32, i32) {
    %c0_i32 = arith.constant 0 : i32
    %c0_i32_0 = arith.constant 0 : i32
    return %arg0, %c0_i32 : i32, i32
  }
}

module attributes {stable_mosaic.version = 11 : i64} {
  func.func @_mm_stats_ds_kernel(%arg0: i32, %arg1: i32, %arg2: memref<128x128xbf16, #tpu.memory_space<vmem>>, %arg3: memref<128x128xbf16, #tpu.memory_space<vmem>>, %arg4: memref<128x128xbf16, #tpu.memory_space<vmem>>, %arg5: memref<128x128xbf16, #tpu.memory_space<vmem>>, %arg6: memref<128x128xf32, #tpu.memory_space<vmem>>, %arg7: memref<8x128xf32, #tpu.memory_space<vmem>>, %arg8: memref<8x128xf32, #tpu.memory_space<vmem>>, %arg9: memref<128x128xf32, #tpu.memory_space<vmem>>) attributes {dimension_semantics = [#tpu.dimension_semantics<parallel>, #tpu.dimension_semantics<arbitrary>], iteration_bounds = array<i64: 1, 1>, scalar_prefetch = 0 : i64, scratch_operands = 1 : i64, tpu.core_type = #tpu.core_type<tc>, window_params = [{transform_indices = @transform_0, window_bounds = array<i64: 128, 128>}, {transform_indices = @transform_1, window_bounds = array<i64: 128, 128>}, {transform_indices = @transform_2, window_bounds = array<i64: 128, 128>}, {pipeline_mode = #tpu.pipeline_mode<synchronous>, transform_indices = @transform_3, window_bounds = array<i64: 128, 128>}, {transform_indices = @transform_4, window_bounds = array<i64: 128, 128>}, {transform_indices = @transform_5, window_bounds = array<i64: 8, 128>}, {transform_indices = @transform_6, window_bounds = array<i64: 8, 128>}]} {
    %c0_i32 = arith.constant 0 : i32
    %0 = arith.cmpi eq, %arg1, %c0_i32 : i32
    %1 = arith.extui %0 : i1 to i32
    %c0_i32_0 = arith.constant 0 : i32
    %2 = arith.cmpi ne, %1, %c0_i32_0 : i32
    scf.if %2 {
      %cst_10 = arith.constant 0.000000e+00 : f32
      %12 = vector.broadcast %cst_10 : f32 to vector<128x128xf32>
      %c0_11 = arith.constant 0 : index
      %c0_12 = arith.constant 0 : index
      %13 = vector.load %arg9[%c0_11, %c0_12] : memref<128x128xf32, #tpu.memory_space<vmem>>, vector<128x128xf32>
      tpu.vector_store %arg9[%c0_11, %c0_12], %12 {strides = array<i32>} : memref<128x128xf32, #tpu.memory_space<vmem>>, vector<128x128xf32>,
    } else {
    }
    %c0 = arith.constant 0 : index
    %c0_1 = arith.constant 0 : index
    %3 = vector.load %arg9[%c0, %c0_1] : memref<128x128xf32, #tpu.memory_space<vmem>>, vector<128x128xf32>
    %c0_2 = arith.constant 0 : index
    %c0_3 = arith.constant 0 : index
    %4 = vector.load %arg2[%c0_2, %c0_3] : memref<128x128xbf16, #tpu.memory_space<vmem>>, vector<128x128xbf16>
    %c0_4 = arith.constant 0 : index
    %c0_5 = arith.constant 0 : index
    %5 = vector.load %arg3[%c0_4, %c0_5] : memref<128x128xbf16, #tpu.memory_space<vmem>>, vector<128x128xbf16>
    %cst = arith.constant dense<0.000000e+00> : vector<128x128xf32>
    %6 = tpu.matmul %4, %5, %cst {dimension_numbers = #tpu.dot_dimension_numbers<[1], [0], [0], [1], [0, 0, 1, 1], [], []>} : vector<128x128xbf16>, vector<128x128xbf16>, vector<128x128xf32> -> vector<128x128xf32>
    %7 = arith.addf %3, %6 : vector<128x128xf32>
    %c0_6 = arith.constant 0 : index
    %c0_7 = arith.constant 0 : index
    %8 = vector.load %arg9[%c0_6, %c0_7] : memref<128x128xf32, #tpu.memory_space<vmem>>, vector<128x128xf32>
    tpu.vector_store %arg9[%c0_6, %c0_7], %7 {strides = array<i32>} : memref<128x128xf32, #tpu.memory_space<vmem>>, vector<128x128xf32>,
    %c0_i32_8 = arith.constant 0 : i32
    %9 = arith.cmpi eq, %arg1, %c0_i32_8 : i32
    %10 = arith.extui %9 : i1 to i32
    %c0_i32_9 = arith.constant 0 : i32
    %11 = arith.cmpi ne, %10, %c0_i32_9 : i32
    scf.if %11 {
      %c0_10 = arith.constant 0 : index
      %c0_11 = arith.constant 0 : index
      %12 = vector.load %arg9[%c0_10, %c0_11] : memref<128x128xf32, #tpu.memory_space<vmem>>, vector<128x128xf32>
      %c0_12 = arith.constant 0 : index
      %c0_13 = arith.constant 0 : index
      %13 = vector.load %arg6[%c0_12, %c0_13] : memref<128x128xf32, #tpu.memory_space<vmem>>, vector<128x128xf32>
      tpu.vector_store %arg6[%c0_12, %c0_13], %12 {strides = array<i32>} : memref<128x128xf32, #tpu.memory_space<vmem>>, vector<128x128xf32>,
      %cst_14 = arith.constant dense<0.000000e+00> : vector<128xf32>
      %14 = vector.multi_reduction <add>, %12, %cst_14 [0] : vector<128x128xf32> to vector<128xf32>
      %15 = vector.shape_cast %14 : vector<128xf32> to vector<1x128xf32>
      %16 = arith.mulf %12, %12 : vector<128x128xf32>
      %cst_15 = arith.constant dense<0.000000e+00> : vector<128xf32>
      %17 = vector.multi_reduction <add>, %16, %cst_15 [0] : vector<128x128xf32> to vector<128xf32>
      %18 = vector.shape_cast %17 : vector<128xf32> to vector<1x128xf32>
      %cst_16 = arith.constant 0.000000e+00 : f32
      %19 = vector.broadcast %cst_16 : f32 to vector<6x128xf32>
      %20 = tpu.concatenate %15, %18, %19 in 0 : vector<1x128xf32>, vector<1x128xf32>, vector<6x128xf32> -> vector<8x128xf32>
      %c0_17 = arith.constant 0 : index
      %c0_18 = arith.constant 0 : index
      %21 = vector.load %arg7[%c0_17, %c0_18] : memref<8x128xf32, #tpu.memory_space<vmem>>, vector<8x128xf32>
      tpu.vector_store %arg7[%c0_17, %c0_18], %20 {strides = array<i32>} : memref<8x128xf32, #tpu.memory_space<vmem>>, vector<8x128xf32>,
      %c0_19 = arith.constant 0 : index
      %c0_20 = arith.constant 0 : index
      %22 = vector.load %arg4[%c0_19, %c0_20] : memref<128x128xbf16, #tpu.memory_space<vmem>>, vector<128x128xbf16>
      %c0_21 = arith.constant 0 : index
      %c0_22 = arith.constant 0 : index
      %23 = vector.load %arg5[%c0_21, %c0_22] : memref<128x128xbf16, #tpu.memory_space<vmem>>, vector<128x128xbf16>
      %cst_23 = arith.constant dense<0.000000e+00> : vector<128x128xf32>
      %24 = tpu.matmul %22, %23, %cst_23 {dimension_numbers = #tpu.dot_dimension_numbers<[1], [0], [0], [1], [0, 0, 1, 1], [], []>} : vector<128x128xbf16>, vector<128x128xbf16>, vector<128x128xf32> -> vector<128x128xf32>
      %cst_24 = arith.constant dense<0.000000e+00> : vector<128xf32>
      %25 = vector.multi_reduction <add>, %24, %cst_24 [0] : vector<128x128xf32> to vector<128xf32>
      %26 = vector.shape_cast %25 : vector<128xf32> to vector<1x128xf32>
      %27 = arith.mulf %24, %24 : vector<128x128xf32>
      %cst_25 = arith.constant dense<0.000000e+00> : vector<128xf32>
      %28 = vector.multi_reduction <add>, %27, %cst_25 [0] : vector<128x128xf32> to vector<128xf32>
      %29 = vector.shape_cast %28 : vector<128xf32> to vector<1x128xf32>
      %cst_26 = arith.constant 0.000000e+00 : f32
      %30 = vector.broadcast %cst_26 : f32 to vector<6x128xf32>
      %31 = tpu.concatenate %26, %29, %30 in 0 : vector<1x128xf32>, vector<1x128xf32>, vector<6x128xf32> -> vector<8x128xf32>
      %c0_27 = arith.constant 0 : index
      %c0_28 = arith.constant 0 : index
      %32 = vector.load %arg8[%c0_27, %c0_28] : memref<8x128xf32, #tpu.memory_space<vmem>>, vector<8x128xf32>
      tpu.vector_store %arg8[%c0_27, %c0_28], %31 {strides = array<i32>} : memref<8x128xf32, #tpu.memory_space<vmem>>, vector<8x128xf32>,
    } else {
    }
    return
  }
  func.func @transform_0(%arg0: i32, %arg1: i32) -> (i32, i32) {
    %c0_i32 = arith.constant 0 : i32
    return %arg0, %arg1 : i32, i32
  }
  func.func @transform_1(%arg0: i32, %arg1: i32) -> (i32, i32) {
    %c0_i32 = arith.constant 0 : i32
    %c0_i32_0 = arith.constant 0 : i32
    return %arg1, %c0_i32 : i32, i32
  }
  func.func @transform_2(%arg0: i32, %arg1: i32) -> (i32, i32) {
    %c0_i32 = arith.constant 0 : i32
    %c0_i32_0 = arith.constant 0 : i32
    return %arg0, %c0_i32 : i32, i32
  }
  func.func @transform_3(%arg0: i32, %arg1: i32) -> (i32, i32) {
    %c0_i32 = arith.constant 0 : i32
    %c0_i32_0 = arith.constant 0 : i32
    %c0_i32_1 = arith.constant 0 : i32
    return %c0_i32, %c0_i32_0 : i32, i32
  }
  func.func @transform_4(%arg0: i32, %arg1: i32) -> (i32, i32) {
    %c0_i32 = arith.constant 0 : i32
    %c0_i32_0 = arith.constant 0 : i32
    return %arg0, %c0_i32 : i32, i32
  }
  func.func @transform_5(%arg0: i32, %arg1: i32) -> (i32, i32) {
    %c0_i32 = arith.constant 0 : i32
    %c0_i32_0 = arith.constant 0 : i32
    return %arg0, %c0_i32 : i32, i32
  }
  func.func @transform_6(%arg0: i32, %arg1: i32) -> (i32, i32) {
    %c0_i32 = arith.constant 0 : i32
    %c0_i32_0 = arith.constant 0 : i32
    return %arg0, %c0_i32 : i32, i32
  }
}

</mosaic_0001>

<llo_original>
// kernel: basic_block_forward.5
$region0: #{basic_block_forward.5}
  #allocation0 [shape = 'u32[]', space=smem, size = 0x4, offset = 0x4, fixed_abs, tag = 'smem constant byte address 0x4 - core index']
  #allocation1 [shape = 'u32[72,128]{1,0:T(1,128)}', space=vmem, size = 0x9000, scoped, tag = 'internal scratch']
  %s0 = inlined_call_operand.vmem [shape: f32[128,128], index: 0, kind: input, shape index: {}]
  %s1 = inlined_call_operand.vmem [shape: f32[8,128], index: 1, kind: input, shape index: {}]
  %s2 = inlined_call_operand.vmem [shape: f32[1,128], index: 2, kind: input, shape index: {}]
  %s3 = inlined_call_operand.vmem [shape: f32[1,128], index: 3, kind: input, shape index: {}]
  %s4 = inlined_call_operand.vmem [shape: f32[128,128], index: 4, kind: output, shape index: {}]
  %s5 = sld [smem:[#allocation0]]
  $region26: #{basic_block_forward.5} parent=0
    _
  %s7 = ssub.s32 1, %s5
  %s8 = scalar_select 0, %s7, %s5
  // Predicated region
  $region2: #{basic_block_forward.5} parent=0 // pred_check
    _
  $region3: #{basic_block_forward.5} parent=0 // pred_check_branch
    %10 = sbr.rel (0) target = $region5
  $region4: #{basic_block_forward.5} parent=0 // pred_region
    _
  $region5: #{basic_block_forward.5} parent=0 // pred_fallthru
    _
  // Predicated region
  $region6: #{basic_block_forward.5} parent=0 // pred_check
    _
  $region7: #{basic_block_forward.5} parent=0 // pred_check_branch
    %12 = sbr.rel (0) target = $region9
  $region8: #{basic_block_forward.5} parent=0 // pred_region
    _
  $region9: #{basic_block_forward.5} parent=0 // pred_fallthru
    _
  // Predicated region
  $region10: #{basic_block_forward.5} parent=0 // pred_check
    _
  $region11: #{basic_block_forward.5} parent=0 // pred_check_branch
    %14 = sbr.rel (0) target = $region13
  $region12: #{basic_block_forward.5} parent=0 // pred_region
    _
  $region13: #{basic_block_forward.5} parent=0 // pred_fallthru
    _
  // Predicated region
  $region14: #{basic_block_forward.5} parent=0 // pred_check
    _
  $region15: #{basic_block_forward.5} parent=0 // pred_check_branch
    %16 = sbr.rel (0) target = $region17
  $region16: #{basic_block_forward.5} parent=0 // pred_region
    _
  $region17: #{basic_block_forward.5} parent=0 // pred_fallthru
    _
  %v17 = vld [vmem:[%s1] sm:$0xff]
  %v18 = vld [vmem:[%s2] sm:$0x1]
  %v19 = vld [vmem:[%s3] sm:$0x1]
  %v20 = vmul.f32 %v17, 0.0078125
  %v21 = vmul.f32 %v20, %v20
  %v23 = vrot.slane %v21, 7
  %v25 = vsub.f32 %v20, %v23
  %v26 = vmax.f32 %v25, 0.0
  %v27 = vadd.f32 %v26, 1e-05
  %v28 = vrsqrt.pop %v27
  %v29 = vmul.f32 %v28, %v27
  %v30 = vmul.f32 %v29, %v28
  %v31 = vmul.f32 0.5, %v30
  %v32 = vsub.f32 1.5, %v31
  %v33 = vmul.f32 %v28, %v32
  %vm34 = vweird.f32 %v27
  %vm35 = vweird.f32 %v28
  %vm36 = vmor %vm34, %vm35
  %v37 = vsel %vm36, %v28, %v33
  %39 = vst [vmem:[#allocation1] sm:$0xff] %v37
  %s40 = scalar_lea.vmem [#allocation1], 1
  %v41 = vld [vmem:[%s40] ss:$9 sm:$0xff]
  %v43 = vmul.f32 %v18, %v41
  %v44 = vmul.f32 %v20, %v43
  %v45 = vsub.f32 %v19, %v44
  %v46 = vld [vmem:[%s0] sm:$0xff]
  %v47 = vld [vmem:[%s0 + $0x8] sm:$0xff]
  %v48 = vld [vmem:[%s0 + $0x10] sm:$0xff]
  %v49 = vld [vmem:[%s0 + $0x18] sm:$0xff]
  %v50 = vld [vmem:[%s0 + $0x20] sm:$0xff]
  %v51 = vld [vmem:[%s0 + $0x28] sm:$0xff]
  %v52 = vld [vmem:[%s0 + $0x30] sm:$0xff]
  %v53 = vld [vmem:[%s0 + $0x38] sm:$0xff]
  %v54 = vld [vmem:[%s0 + $0x40] sm:$0xff]
  %v55 = vld [vmem:[%s0 + $0x48] sm:$0xff]
  %v56 = vld [vmem:[%s0 + $0x50] sm:$0xff]
  %v57 = vld [vmem:[%s0 + $0x58] sm:$0xff]
  %v58 = vld [vmem:[%s0 + $0x60] sm:$0xff]
  %v59 = vld [vmem:[%s0 + $0x68] sm:$0xff]
  %v60 = vld [vmem:[%s0 + $0x70] sm:$0xff]
  %v61 = vld [vmem:[%s0 + $0x78] sm:$0xff]
  %v63 = vperm.slane %v43, 0
  %v65 = vmul.f32 %v46, %v63
  %v66 = vmul.f32 %v47, %v63
  %v67 = vmul.f32 %v48, %v63
  %v68 = vmul.f32 %v49, %v63
  %v69 = vmul.f32 %v50, %v63
  %v70 = vmul.f32 %v51, %v63
  %v71 = vmul.f32 %v52, %v63
  %v72 = vmul.f32 %v53, %v63
  %v73 = vmul.f32 %v54, %v63
  %v74 = vmul.f32 %v55, %v63
  %v75 = vmul.f32 %v56, %v63
  %v76 = vmul.f32 %v57, %v63
  %v77 = vmul.f32 %v58, %v63
  %v78 = vmul.f32 %v59, %v63
  %v79 = vmul.f32 %v60, %v63
  %v80 = vmul.f32 %v61, %v63
  %v82 = vperm.slane %v45, 0
  %v84 = vadd.f32 %v65, %v82
  %v85 = vadd.f32 %v66, %v82
  %v86 = vadd.f32 %v67, %v82
  %v87 = vadd.f32 %v68, %v82
  %v88 = vadd.f32 %v69, %v82
  %v89 = vadd.f32 %v70, %v82
  %v90 = vadd.f32 %v71, %v82
  %v91 = vadd.f32 %v72, %v82
  %v92 = vadd.f32 %v73, %v82
  %v93 = vadd.f32 %v74, %v82
  %v94 = vadd.f32 %v75, %v82
  %v95 = vadd.f32 %v76, %v82
  %v96 = vadd.f32 %v77, %v82
  %v97 = vadd.f32 %v78, %v82
  %v98 = vadd.f32 %v79, %v82
  %v99 = vadd.f32 %v80, %v82
  %v100 = vmax.f32 %v84, 0.0
  %v101 = vmax.f32 %v85, 0.0
  %v102 = vmax.f32 %v86, 0.0
  %v103 = vmax.f32 %v87, 0.0
  %v104 = vmax.f32 %v88, 0.0
  %v105 = vmax.f32 %v89, 0.0
  %v106 = vmax.f32 %v90, 0.0
  %v107 = vmax.f32 %v91, 0.0
  %v108 = vmax.f32 %v92, 0.0
  %v109 = vmax.f32 %v93, 0.0
  %v110 = vmax.f32 %v94, 0.0
  %v111 = vmax.f32 %v95, 0.0
  %v112 = vmax.f32 %v96, 0.0
  %v113 = vmax.f32 %v97, 0.0
  %v114 = vmax.f32 %v98, 0.0
  %v115 = vmax.f32 %v99, 0.0
  %116 = vst [vmem:[%s4] sm:$0xff] %v100
  %117 = vst [vmem:[%s4 + $0x8] sm:$0xff] %v101
  %118 = vst [vmem:[%s4 + $0x10] sm:$0xff] %v102
  %119 = vst [vmem:[%s4 + $0x18] sm:$0xff] %v103
  %120 = vst [vmem:[%s4 + $0x20] sm:$0xff] %v104
  %121 = vst [vmem:[%s4 + $0x28] sm:$0xff] %v105
  %122 = vst [vmem:[%s4 + $0x30] sm:$0xff] %v106
  %123 = vst [vmem:[%s4 + $0x38] sm:$0xff] %v107
  %124 = vst [vmem:[%s4 + $0x40] sm:$0xff] %v108
  %125 = vst [vmem:[%s4 + $0x48] sm:$0xff] %v109
  %126 = vst [vmem:[%s4 + $0x50] sm:$0xff] %v110
  %127 = vst [vmem:[%s4 + $0x58] sm:$0xff] %v111
  %128 = vst [vmem:[%s4 + $0x60] sm:$0xff] %v112
  %129 = vst [vmem:[%s4 + $0x68] sm:$0xff] %v113
  %130 = vst [vmem:[%s4 + $0x70] sm:$0xff] %v114
  %131 = vst [vmem:[%s4 + $0x78] sm:$0xff] %v115
  // Predicated region
  $region18: #{basic_block_forward.5} parent=0 // pred_check
    _
  $region19: #{basic_block_forward.5} parent=0 // pred_check_branch
    %133 = sbr.rel (0) target = $region21
  $region20: #{basic_block_forward.5} parent=0 // pred_region
    _
  $region21: #{basic_block_forward.5} parent=0 // pred_fallthru
    _
  // Predicated region
  $region22: #{basic_block_forward.5} parent=0 // pred_check
    _
  $region23: #{basic_block_forward.5} parent=0 // pred_check_branch
    %135 = sbr.rel (0) target = $region25
  $region24: #{basic_block_forward.5} parent=0 // pred_region
    _
  $region25: #{basic_block_forward.5} parent=0 // pred_fallthru
    _

// kernel: basic_block_forward.4
$region0: #{basic_block_forward.4}
  #allocation0 [shape = 'u32[]', space=smem, size = 0x4, offset = 0x4, fixed_abs, tag = 'smem constant byte address 0x4 - core index']
  #allocation1 [shape = 'u32[72,128]{1,0:T(1,128)}', space=vmem, size = 0x9000, scoped, tag = 'internal scratch']
  #allocation2 [shape = 'f32[128,128]{1,0:T(8,128)}', space=vmem, size = 0x10000, scoped, tag = 'scratch operand']
  %s0 = inlined_call_operand.vmem [shape: bf16[128,128], index: 0, kind: input, shape index: {}]
  %s1 = inlined_call_operand.vmem [shape: bf16[128,128], index: 1, kind: input, shape index: {}]
  %s2 = inlined_call_operand.vmem [shape: f32[128,128], index: 2, kind: output, shape index: {0}]
  %s3 = inlined_call_operand.vmem [shape: f32[8,128], index: 3, kind: output, shape index: {1}]
  %4 = xla_tuple %s2, %s3
  %s5 = sld [smem:[#allocation0]]
  $region34: #{basic_block_forward.4} parent=0
    _
  %s7 = ssub.s32 1, %s5
  %s8 = scalar_select 0, %s7, %s5
  // Predicated region
  $region2: #{basic_block_forward.4} parent=0 // pred_check
    _
  $region3: #{basic_block_forward.4} parent=0 // pred_check_branch
    %10 = sbr.rel (0) target = $region5
  $region4: #{basic_block_forward.4} parent=0 // pred_region
    _
  $region5: #{basic_block_forward.4} parent=0 // pred_fallthru
    _
  // Predicated region
  $region6: #{basic_block_forward.4} parent=0 // pred_check
    _
  $region7: #{basic_block_forward.4} parent=0 // pred_check_branch
    %12 = sbr.rel (0) target = $region9
  $region8: #{basic_block_forward.4} parent=0 // pred_region
    _
  $region9: #{basic_block_forward.4} parent=0 // pred_fallthru
    _
  %p13 = scmp.eq.s32.totalorder 0, 0
  // Predicated region
  $region10: #{basic_block_forward.4} parent=0 // pred_check
    %p14 = pneg %p13
  $region11: #{basic_block_forward.4} parent=0 // pred_check_branch
    %16 = sbr.rel (%p14) target = $region13
  $region12: #{basic_block_forward.4} parent=0 // pred_region
    %17 = vst [vmem:[#allocation2] sm:$0xff] 0.0
    %18 = vst [vmem:[#allocation2 + $0x8] sm:$0xff] 0.0
    %19 = vst [vmem:[#allocation2 + $0x10] sm:$0xff] 0.0
    %20 = vst [vmem:[#allocation2 + $0x18] sm:$0xff] 0.0
    %21 = vst [vmem:[#allocation2 + $0x20] sm:$0xff] 0.0
    %22 = vst [vmem:[#allocation2 + $0x28] sm:$0xff] 0.0
    %23 = vst [vmem:[#allocation2 + $0x30] sm:$0xff] 0.0
    %24 = vst [vmem:[#allocation2 + $0x38] sm:$0xff] 0.0
    %25 = vst [vmem:[#allocation2 + $0x40] sm:$0xff] 0.0
    %26 = vst [vmem:[#allocation2 + $0x48] sm:$0xff] 0.0
    %27 = vst [vmem:[#allocation2 + $0x50] sm:$0xff] 0.0
    %28 = vst [vmem:[#allocation2 + $0x58] sm:$0xff] 0.0
    %29 = vst [vmem:[#allocation2 + $0x60] sm:$0xff] 0.0
    %30 = vst [vmem:[#allocation2 + $0x68] sm:$0xff] 0.0
    %31 = vst [vmem:[#allocation2 + $0x70] sm:$0xff] 0.0
    %32 = vst [vmem:[#allocation2 + $0x78] sm:$0xff] 0.0
  $region13: #{basic_block_forward.4} parent=0 // pred_fallthru
    _
  %v33 = vld [vmem:[#allocation2] sm:$0xff]
  %v34 = vld [vmem:[#allocation2 + $0x8] sm:$0xff]
  %v35 = vld [vmem:[#allocation2 + $0x10] sm:$0xff]
  %v36 = vld [vmem:[#allocation2 + $0x18] sm:$0xff]
  %v37 = vld [vmem:[#allocation2 + $0x20] sm:$0xff]
  %v38 = vld [vmem:[#allocation2 + $0x28] sm:$0xff]
  %v39 = vld [vmem:[#allocation2 + $0x30] sm:$0xff]
  %v40 = vld [vmem:[#allocation2 + $0x38] sm:$0xff]
  %v41 = vld [vmem:[#allocation2 + $0x40] sm:$0xff]
  %v42 = vld [vmem:[#allocation2 + $0x48] sm:$0xff]
  %v43 = vld [vmem:[#allocation2 + $0x50] sm:$0xff]
  %v44 = vld [vmem:[#allocation2 + $0x58] sm:$0xff]
  %v45 = vld [vmem:[#allocation2 + $0x60] sm:$0xff]
  %v46 = vld [vmem:[#allocation2 + $0x68] sm:$0xff]
  %v47 = vld [vmem:[#allocation2 + $0x70] sm:$0xff]
  %v48 = vld [vmem:[#allocation2 + $0x78] sm:$0xff]
  %v49 = vld [vmem:[%s0] sm:$0xf]
  %v50 = vld [vmem:[%s0 + $0x4] sm:$0xf]
  %v51 = vld [vmem:[%s0 + $0x8] sm:$0xf]
  %v52 = vld [vmem:[%s0 + $0xc] sm:$0xf]
  %v53 = vld [vmem:[%s0 + $0x10] sm:$0xf]
  %v54 = vld [vmem:[%s0 + $0x14] sm:$0xf]
  %v55 = vld [vmem:[%s0 + $0x18] sm:$0xf]
  %v56 = vld [vmem:[%s0 + $0x1c] sm:$0xf]
  %v57 = vld [vmem:[%s0 + $0x20] sm:$0xf]
  %v58 = vld [vmem:[%s0 + $0x24] sm:$0xf]
  %v59 = vld [vmem:[%s0 + $0x28] sm:$0xf]
  %v60 = vld [vmem:[%s0 + $0x2c] sm:$0xf]
  %v61 = vld [vmem:[%s0 + $0x30] sm:$0xf]
  %v62 = vld [vmem:[%s0 + $0x34] sm:$0xf]
  %v63 = vld [vmem:[%s0 + $0x38] sm:$0xf]
  %v64 = vld [vmem:[%s0 + $0x3c] sm:$0xf]
  %v65 = vld [vmem:[%s1] sm:$0xf]
  %v66 = vld [vmem:[%s1 + $0x4] sm:$0xf]
  %v67 = vld [vmem:[%s1 + $0x8] sm:$0xf]
  %v68 = vld [vmem:[%s1 + $0xc] sm:$0xf]
  %v69 = vld [vmem:[%s1 + $0x10] sm:$0xf]
  %v70 = vld [vmem:[%s1 + $0x14] sm:$0xf]
  %v71 = vld [vmem:[%s1 + $0x18] sm:$0xf]
  %v72 = vld [vmem:[%s1 + $0x1c] sm:$0xf]
  %v73 = vld [vmem:[%s1 + $0x20] sm:$0xf]
  %v74 = vld [vmem:[%s1 + $0x24] sm:$0xf]
  %v75 = vld [vmem:[%s1 + $0x28] sm:$0xf]
  %v76 = vld [vmem:[%s1 + $0x2c] sm:$0xf]
  %v77 = vld [vmem:[%s1 + $0x30] sm:$0xf]
  %v78 = vld [vmem:[%s1 + $0x34] sm:$0xf]
  %v79 = vld [vmem:[%s1 + $0x38] sm:$0xf]
  %v80 = vld [vmem:[%s1 + $0x3c] sm:$0xf]
  %v97 = vunpack.c.l.b16 %v49
  %v98 = vunpack.c.l.b16 %v50
  %v99 = vunpack.c.l.b16 %v51
  %v100 = vunpack.c.l.b16 %v52
  %v101 = vunpack.c.l.b16 %v53
  %v102 = vunpack.c.l.b16 %v54
  %v103 = vunpack.c.l.b16 %v55
  %v104 = vunpack.c.l.b16 %v56
  %v105 = vunpack.c.l.b16 %v57
  %v106 = vunpack.c.l.b16 %v58
  %v107 = vunpack.c.l.b16 %v59
  %v108 = vunpack.c.l.b16 %v60
  %v109 = vunpack.c.l.b16 %v61
  %v110 = vunpack.c.l.b16 %v62
  %v111 = vunpack.c.l.b16 %v63
  %v112 = vunpack.c.l.b16 %v64
  %v113 = vpack.c.b16 %v98, %v97
  %v114 = vpack.c.b16 %v100, %v99
  %v115 = vpack.c.b16 %v102, %v101
  %v116 = vpack.c.b16 %v104, %v103
  %v117 = vpack.c.b16 %v106, %v105
  %v118 = vpack.c.b16 %v108, %v107
  %v119 = vpack.c.b16 %v110, %v109
  %v120 = vpack.c.b16 %v112, %v111
  %v145 = vunpack.c.l.b16 %v65
  %v146 = vunpack.c.l.b16 %v66
  %v147 = vunpack.c.l.b16 %v67
  %v148 = vunpack.c.l.b16 %v68
  %v149 = vunpack.c.l.b16 %v69
  %v150 = vunpack.c.l.b16 %v70
  %v151 = vunpack.c.l.b16 %v71
  %v152 = vunpack.c.l.b16 %v72
  %v153 = vunpack.c.l.b16 %v73
  %v154 = vunpack.c.l.b16 %v74
  %v155 = vunpack.c.l.b16 %v75
  %v156 = vunpack.c.l.b16 %v76
  %v157 = vunpack.c.l.b16 %v77
  %v158 = vunpack.c.l.b16 %v78
  %v159 = vunpack.c.l.b16 %v79
  %v160 = vunpack.c.l.b16 %v80
  %v161 = vpack.c.b16 %v146, %v145
  %v162 = vpack.c.b16 %v148, %v147
  %v163 = vpack.c.b16 %v150, %v149
  %v164 = vpack.c.b16 %v152, %v151
  %v165 = vpack.c.b16 %v154, %v153
  %v166 = vpack.c.b16 %v156, %v155
  %v167 = vpack.c.b16 %v158, %v157
  %v168 = vpack.c.b16 %v160, %v159
  %177 = vmatpush.bf16.msra.mxu0 %v168
  %178 = vmatpush.bf16.msra.mxu0 %v167
  %179 = vmatpush.bf16.msra.mxu0 %v166
  %180 = vmatpush.bf16.msra.mxu0 %v165
  %181 = vmatpush.bf16.msra.mxu0 %v164
  %182 = vmatpush.bf16.msra.mxu0 %v163
  %183 = vmatpush.bf16.msra.mxu0 %v162
  %184 = vmatpush.bf16.msra.mxu0 %v161
  %185 = vmatmul.bf16.gmra.mxu0 %v113
  %v186 = vpop.f32.mrf.mxu0
  %v187 = vadd.f32 0.0, %v186
  %v188 = vpop.f32.mrf.mxu0
  %v189 = vadd.f32 0.0, %v188
  %190 = vmatmul.bf16.gmra.mxu0 %v114
  %v191 = vpop.f32.mrf.mxu0
  %v192 = vadd.f32 0.0, %v191
  %v193 = vpop.f32.mrf.mxu0
  %v194 = vadd.f32 0.0, %v193
  %195 = vmatmul.bf16.gmra.mxu0 %v115
  %v196 = vpop.f32.mrf.mxu0
  %v197 = vadd.f32 0.0, %v196
  %v198 = vpop.f32.mrf.mxu0
  %v199 = vadd.f32 0.0, %v198
  %200 = vmatmul.bf16.gmra.mxu0 %v116
  %v201 = vpop.f32.mrf.mxu0
  %v202 = vadd.f32 0.0, %v201
  %v203 = vpop.f32.mrf.mxu0
  %v204 = vadd.f32 0.0, %v203
  %205 = vmatmul.bf16.gmra.mxu0 %v117
  %v206 = vpop.f32.mrf.mxu0
  %v207 = vadd.f32 0.0, %v206
  %v208 = vpop.f32.mrf.mxu0
  %v209 = vadd.f32 0.0, %v208
  %210 = vmatmul.bf16.gmra.mxu0 %v118
  %v211 = vpop.f32.mrf.mxu0
  %v212 = vadd.f32 0.0, %v211
  %v213 = vpop.f32.mrf.mxu0
  %v214 = vadd.f32 0.0, %v213
  %215 = vmatmul.bf16.gmra.mxu0 %v119
  %v216 = vpop.f32.mrf.mxu0
  %v217 = vadd.f32 0.0, %v216
  %v218 = vpop.f32.mrf.mxu0
  %v219 = vadd.f32 0.0, %v218
  %220 = vmatmul.bf16.gmra.mxu0 %v120
  %v221 = vpop.f32.mrf.mxu0
  %v222 = vadd.f32 0.0, %v221
  %v223 = vpop.f32.mrf.mxu0
  %v224 = vadd.f32 0.0, %v223
  %225 = vdwg.mxu0
  %v226 = vadd.f32 %v33, %v187
  %v227 = vadd.f32 %v34, %v189
  %v228 = vadd.f32 %v35, %v192
  %v229 = vadd.f32 %v36, %v194
  %v230 = vadd.f32 %v37, %v197
  %v231 = vadd.f32 %v38, %v199
  %v232 = vadd.f32 %v39, %v202
  %v233 = vadd.f32 %v40, %v204
  %v234 = vadd.f32 %v41, %v207
  %v235 = vadd.f32 %v42, %v209
  %v236 = vadd.f32 %v43, %v212
  %v237 = vadd.f32 %v44, %v214
  %v238 = vadd.f32 %v45, %v217
  %v239 = vadd.f32 %v46, %v219
  %v240 = vadd.f32 %v47, %v222
  %v241 = vadd.f32 %v48, %v224
  %242 = vst [vmem:[#allocation2] sm:$0xff] %v226
  %243 = vst [vmem:[#allocation2 + $0x8] sm:$0xff] %v227
  %244 = vst [vmem:[#allocation2 + $0x10] sm:$0xff] %v228
  %245 = vst [vmem:[#allocation2 + $0x18] sm:$0xff] %v229
  %246 = vst [vmem:[#allocation2 + $0x20] sm:$0xff] %v230
  %247 = vst [vmem:[#allocation2 + $0x28] sm:$0xff] %v231
  %248 = vst [vmem:[#allocation2 + $0x30] sm:$0xff] %v232
  %249 = vst [vmem:[#allocation2 + $0x38] sm:$0xff] %v233
  %250 = vst [vmem:[#allocation2 + $0x40] sm:$0xff] %v234
  %251 = vst [vmem:[#allocation2 + $0x48] sm:$0xff] %v235
  %252 = vst [vmem:[#allocation2 + $0x50] sm:$0xff] %v236
  %253 = vst [vmem:[#allocation2 + $0x58] sm:$0xff] %v237
  %254 = vst [vmem:[#allocation2 + $0x60] sm:$0xff] %v238
  %255 = vst [vmem:[#allocation2 + $0x68] sm:$0xff] %v239
  %256 = vst [vmem:[#allocation2 + $0x70] sm:$0xff] %v240
  %257 = vst [vmem:[#allocation2 + $0x78] sm:$0xff] %v241
  // Predicated region
  $region14: #{basic_block_forward.4} parent=0 // pred_check
    %p258 = pneg %p13
  $region15: #{basic_block_forward.4} parent=0 // pred_check_branch
    %260 = sbr.rel (%p258) target = $region17
  $region16: #{basic_block_forward.4} parent=0 // pred_region
    %v261 = vld [vmem:[#allocation2] sm:$0xff]
    %v262 = vld [vmem:[#allocation2 + $0x8] sm:$0xff]
    %v263 = vld [vmem:[#allocation2 + $0x10] sm:$0xff]
    %v264 = vld [vmem:[#allocation2 + $0x18] sm:$0xff]
    %v265 = vld [vmem:[#allocation2 + $0x20] sm:$0xff]
    %v266 = vld [vmem:[#allocation2 + $0x28] sm:$0xff]
    %v267 = vld [vmem:[#allocation2 + $0x30] sm:$0xff]
    %v268 = vld [vmem:[#allocation2 + $0x38] sm:$0xff]
    %v269 = vld [vmem:[#allocation2 + $0x40] sm:$0xff]
    %v270 = vld [vmem:[#allocation2 + $0x48] sm:$0xff]
    %v271 = vld [vmem:[#allocation2 + $0x50] sm:$0xff]
    %v272 = vld [vmem:[#allocation2 + $0x58] sm:$0xff]
    %v273 = vld [vmem:[#allocation2 + $0x60] sm:$0xff]
    %v274 = vld [vmem:[#allocation2 + $0x68] sm:$0xff]
    %v275 = vld [vmem:[#allocation2 + $0x70] sm:$0xff]
    %v276 = vld [vmem:[#allocation2 + $0x78] sm:$0xff]
    %277 = vst [vmem:[%s2] sm:$0xff] %v261
    %278 = vst [vmem:[%s2 + $0x8] sm:$0xff] %v262
    %279 = vst [vmem:[%s2 + $0x10] sm:$0xff] %v263
    %280 = vst [vmem:[%s2 + $0x18] sm:$0xff] %v264
    %281 = vst [vmem:[%s2 + $0x20] sm:$0xff] %v265
    %282 = vst [vmem:[%s2 + $0x28] sm:$0xff] %v266
    %283 = vst [vmem:[%s2 + $0x30] sm:$0xff] %v267
    %284 = vst [vmem:[%s2 + $0x38] sm:$0xff] %v268
    %285 = vst [vmem:[%s2 + $0x40] sm:$0xff] %v269
    %286 = vst [vmem:[%s2 + $0x48] sm:$0xff] %v270
    %287 = vst [vmem:[%s2 + $0x50] sm:$0xff] %v271
    %288 = vst [vmem:[%s2 + $0x58] sm:$0xff] %v272
    %289 = vst [vmem:[%s2 + $0x60] sm:$0xff] %v273
    %290 = vst [vmem:[%s2 + $0x68] sm:$0xff] %v274
    %291 = vst [vmem:[%s2 + $0x70] sm:$0xff] %v275
    %292 = vst [vmem:[%s2 + $0x78] sm:$0xff] %v276
    %v293 = vadd.f32 %v261, %v262
    %v294 = vadd.f32 %v293, %v263
    %v295 = vadd.f32 %v294, %v264
    %v296 = vadd.f32 %v295, %v265
    %v297 = vadd.f32 %v296, %v266
    %v298 = vadd.f32 %v297, %v267
    %v299 = vadd.f32 %v298, %v268
    %v300 = vadd.f32 %v299, %v269
    %v301 = vadd.f32 %v300, %v270
    %v302 = vadd.f32 %v301, %v271
    %v303 = vadd.f32 %v302, %v272
    %v304 = vadd.f32 %v303, %v273
    %v305 = vadd.f32 %v304, %v274
    %v306 = vadd.f32 %v305, %v275
    %v307 = vadd.f32 %v306, %v276
    %v308 = vrot.slane %v307, 4
    %v309 = vadd.f32 %v307, %v308
    %v310 = vrot.slane %v309, 2
    %v311 = vadd.f32 %v309, %v310
    %v312 = vrot.slane %v311, 1
    %v313 = vadd.f32 %v311, %v312
    %v314 = vmul.f32 %v261, %v261
    %v315 = vmul.f32 %v262, %v262
    %v316 = vmul.f32 %v263, %v263
    %v317 = vmul.f32 %v264, %v264
    %v318 = vmul.f32 %v265, %v265
    %v319 = vmul.f32 %v266, %v266
    %v320 = vmul.f32 %v267, %v267
    %v321 = vmul.f32 %v268, %v268
    %v322 = vmul.f32 %v269, %v269
    %v323 = vmul.f32 %v270, %v270
    %v324 = vmul.f32 %v271, %v271
    %v325 = vmul.f32 %v272, %v272
    %v326 = vmul.f32 %v273, %v273
    %v327 = vmul.f32 %v274, %v274
    %v328 = vmul.f32 %v275, %v275
    %v329 = vmul.f32 %v276, %v276
    %v330 = vadd.f32 %v314, %v315
    %v331 = vadd.f32 %v330, %v316
    %v332 = vadd.f32 %v331, %v317
    %v333 = vadd.f32 %v332, %v318
    %v334 = vadd.f32 %v333, %v319
    %v335 = vadd.f32 %v334, %v320
    %v336 = vadd.f32 %v335, %v321
    %v337 = vadd.f32 %v336, %v322
    %v338 = vadd.f32 %v337, %v323
    %v339 = vadd.f32 %v338, %v324
    %v340 = vadd.f32 %v339, %v325
    %v341 = vadd.f32 %v340, %v326
    %v342 = vadd.f32 %v341, %v327
    %v343 = vadd.f32 %v342, %v328
    %v344 = vadd.f32 %v343, %v329
    %v345 = vrot.slane %v344, 4
    %v346 = vadd.f32 %v344, %v345
    %v347 = vrot.slane %v346, 2
    %v348 = vadd.f32 %v346, %v347
    %v349 = vrot.slane %v348, 1
    %v350 = vadd.f32 %v348, %v349
    %vm351 = vcmask 1040384
    %v352 = vsel %vm351, %v313, %v350
    %vm353 = vcmask 1041408
    %v354 = vsel %vm353, %v352, 0.0
    %355 = vst [vmem:[%s3] sm:$0xff] %v354
  $region17: #{basic_block_forward.4} parent=0 // pred_fallthru
    _
  // Predicated region
  $region18: #{basic_block_forward.4} parent=0 // pred_check
    _
  $region19: #{basic_block_forward.4} parent=0 // pred_check_branch
    %357 = sbr.rel (0) target = $region21
  $region20: #{basic_block_forward.4} parent=0 // pred_region
    _
  $region21: #{basic_block_forward.4} parent=0 // pred_fallthru
    _
  // Predicated region
  $region22: #{basic_block_forward.4} parent=0 // pred_check
    _
  $region23: #{basic_block_forward.4} parent=0 // pred_check_branch
    %359 = sbr.rel (0) target = $region25
  $region24: #{basic_block_forward.4} parent=0 // pred_region
    _
  $region25: #{basic_block_forward.4} parent=0 // pred_fallthru
    _
  // Predicated region
  $region26: #{basic_block_forward.4} parent=0 // pred_check
    _
  $region27: #{basic_block_forward.4} parent=0 // pred_check_branch
    %361 = sbr.rel (0) target = $region29
  $region28: #{basic_block_forward.4} parent=0 // pred_region
    _
  $region29: #{basic_block_forward.4} parent=0 // pred_fallthru
    _
  // Predicated region
  $region30: #{basic_block_forward.4} parent=0 // pred_check
    _
  $region31: #{basic_block_forward.4} parent=0 // pred_check_branch
    %363 = sbr.rel (0) target = $region33
  $region32: #{basic_block_forward.4} parent=0 // pred_region
    _
  $region33: #{basic_block_forward.4} parent=0 // pred_fallthru
    _

// kernel: basic_block_forward.7
$region0: #{basic_block_forward.7}
  #allocation0 [shape = 'u32[]', space=smem, size = 0x4, offset = 0x4, fixed_abs, tag = 'smem constant byte address 0x4 - core index']
  #allocation1 [shape = 'u32[72,128]{1,0:T(1,128)}', space=vmem, size = 0x9000, scoped, tag = 'internal scratch']
  %s0 = inlined_call_operand.vmem [shape: f32[128,128], index: 0, kind: input, shape index: {}]
  %s1 = inlined_call_operand.vmem [shape: f32[8,128], index: 1, kind: input, shape index: {}]
  %s2 = inlined_call_operand.vmem [shape: f32[1,128], index: 2, kind: input, shape index: {}]
  %s3 = inlined_call_operand.vmem [shape: f32[1,128], index: 3, kind: input, shape index: {}]
  %s4 = inlined_call_operand.vmem [shape: bf16[128,128], index: 4, kind: input, shape index: {}]
  %s5 = inlined_call_operand.vmem [shape: bf16[128,128], index: 5, kind: input, shape index: {}]
  %s6 = inlined_call_operand.vmem [shape: f32[8,128], index: 6, kind: input, shape index: {}]
  %s7 = inlined_call_operand.vmem [shape: f32[1,128], index: 7, kind: input, shape index: {}]
  %s8 = inlined_call_operand.vmem [shape: f32[1,128], index: 8, kind: input, shape index: {}]
  %s9 = inlined_call_operand.vmem [shape: f32[128,128], index: 9, kind: output, shape index: {}]
  %s10 = sld [smem:[#allocation0]]
  $region46: #{basic_block_forward.7} parent=0
    _
  %s12 = ssub.s32 1, %s10
  %s13 = scalar_select 0, %s12, %s10
  // Predicated region
  $region2: #{basic_block_forward.7} parent=0 // pred_check
    _
  $region3: #{basic_block_forward.7} parent=0 // pred_check_branch
    %15 = sbr.rel (0) target = $region5
  $region4: #{basic_block_forward.7} parent=0 // pred_region
    _
  $region5: #{basic_block_forward.7} parent=0 // pred_fallthru
    _
  // Predicated region
  $region6: #{basic_block_forward.7} parent=0 // pred_check
    _
  $region7: #{basic_block_forward.7} parent=0 // pred_check_branch
    %17 = sbr.rel (0) target = $region9
  $region8: #{basic_block_forward.7} parent=0 // pred_region
    _
  $region9: #{basic_block_forward.7} parent=0 // pred_fallthru
    _
  // Predicated region
  $region10: #{basic_block_forward.7} parent=0 // pred_check
    _
  $region11: #{basic_block_forward.7} parent=0 // pred_check_branch
    %19 = sbr.rel (0) target = $region13
  $region12: #{basic_block_forward.7} parent=0 // pred_region
    _
  $region13: #{basic_block_forward.7} parent=0 // pred_fallthru
    _
  // Predicated region
  $region14: #{basic_block_forward.7} parent=0 // pred_check
    _
  $region15: #{basic_block_forward.7} parent=0 // pred_check_branch
    %21 = sbr.rel (0) target = $region17
  $region16: #{basic_block_forward.7} parent=0 // pred_region
    _
  $region17: #{basic_block_forward.7} parent=0 // pred_fallthru
    _
  // Predicated region
  $region18: #{basic_block_forward.7} parent=0 // pred_check
    _
  $region19: #{basic_block_forward.7} parent=0 // pred_check_branch
    %23 = sbr.rel (0) target = $region21
  $region20: #{basic_block_forward.7} parent=0 // pred_region
    _
  $region21: #{basic_block_forward.7} parent=0 // pred_fallthru
    _
  // Predicated region
  $region22: #{basic_block_forward.7} parent=0 // pred_check
    _
  $region23: #{basic_block_forward.7} parent=0 // pred_check_branch
    %25 = sbr.rel (0) target = $region25
  $region24: #{basic_block_forward.7} parent=0 // pred_region
    _
  $region25: #{basic_block_forward.7} parent=0 // pred_fallthru
    _
  // Predicated region
  $region26: #{basic_block_forward.7} parent=0 // pred_check
    _
  $region27: #{basic_block_forward.7} parent=0 // pred_check_branch
    %27 = sbr.rel (0) target = $region29
  $region28: #{basic_block_forward.7} parent=0 // pred_region
    _
  $region29: #{basic_block_forward.7} parent=0 // pred_fallthru
    _
  // Predicated region
  $region30: #{basic_block_forward.7} parent=0 // pred_check
    _
  $region31: #{basic_block_forward.7} parent=0 // pred_check_branch
    %29 = sbr.rel (0) target = $region33
  $region32: #{basic_block_forward.7} parent=0 // pred_region
    _
  $region33: #{basic_block_forward.7} parent=0 // pred_fallthru
    _
  // Predicated region
  $region34: #{basic_block_forward.7} parent=0 // pred_check
    _
  $region35: #{basic_block_forward.7} parent=0 // pred_check_branch
    %31 = sbr.rel (0) target = $region37
  $region36: #{basic_block_forward.7} parent=0 // pred_region
    _
  $region37: #{basic_block_forward.7} parent=0 // pred_fallthru
    _
  %v32 = vld [vmem:[%s1] sm:$0xff]
  %v33 = vld [vmem:[%s2] sm:$0x1]
  %v34 = vld [vmem:[%s3] sm:$0x1]
  %v35 = vmul.f32 %v32, 0.0078125
  %v36 = vmul.f32 %v35, %v35
  %v38 = vrot.slane %v36, 7
  %v40 = vsub.f32 %v35, %v38
  %v41 = vmax.f32 %v40, 0.0
  %v42 = vadd.f32 %v41, 1e-05
  %v43 = vrsqrt.pop %v42
  %v44 = vmul.f32 %v43, %v42
  %v45 = vmul.f32 %v44, %v43
  %v46 = vmul.f32 0.5, %v45
  %v47 = vsub.f32 1.5, %v46
  %v48 = vmul.f32 %v43, %v47
  %vm49 = vweird.f32 %v42
  %vm50 = vweird.f32 %v43
  %vm51 = vmor %vm49, %vm50
  %v52 = vsel %vm51, %v43, %v48
  %54 = vst [vmem:[#allocation1] sm:$0xff] %v52
  %s55 = scalar_lea.vmem [#allocation1], 1
  %v56 = vld [vmem:[%s55] ss:$9 sm:$0xff]
  %v58 = vmul.f32 %v33, %v56
  %v59 = vmul.f32 %v35, %v58
  %v60 = vsub.f32 %v34, %v59
  %v61 = vld [vmem:[%s6] sm:$0xff]
  %v62 = vld [vmem:[%s7] sm:$0x1]
  %v63 = vld [vmem:[%s8] sm:$0x1]
  %v64 = vmul.f32 %v61, 0.0078125
  %v65 = vmul.f32 %v64, %v64
  %v67 = vrot.slane %v65, 7
  %v69 = vsub.f32 %v64, %v67
  %v70 = vmax.f32 %v69, 0.0
  %v71 = vadd.f32 %v70, 1e-05
  %v72 = vrsqrt.pop %v71
  %v73 = vmul.f32 %v72, %v71
  %v74 = vmul.f32 %v73, %v72
  %v75 = vmul.f32 0.5, %v74
  %v76 = vsub.f32 1.5, %v75
  %v77 = vmul.f32 %v72, %v76
  %vm78 = vweird.f32 %v71
  %vm79 = vweird.f32 %v72
  %vm80 = vmor %vm78, %vm79
  %v81 = vsel %vm80, %v72, %v77
  %83 = vst [vmem:[#allocation1] sm:$0xff] %v81
  %s84 = scalar_lea.vmem [#allocation1], 1
  %v85 = vld [vmem:[%s84] ss:$9 sm:$0xff]
  %v87 = vmul.f32 %v62, %v85
  %v88 = vmul.f32 %v64, %v87
  %v89 = vsub.f32 %v63, %v88
  %v90 = vld [vmem:[%s4] sm:$0xf]
  %v91 = vld [vmem:[%s4 + $0x4] sm:$0xf]
  %v92 = vld [vmem:[%s4 + $0x8] sm:$0xf]
  %v93 = vld [vmem:[%s4 + $0xc] sm:$0xf]
  %v94 = vld [vmem:[%s4 + $0x10] sm:$0xf]
  %v95 = vld [vmem:[%s4 + $0x14] sm:$0xf]
  %v96 = vld [vmem:[%s4 + $0x18] sm:$0xf]
  %v97 = vld [vmem:[%s4 + $0x1c] sm:$0xf]
  %v98 = vld [vmem:[%s4 + $0x20] sm:$0xf]
  %v99 = vld [vmem:[%s4 + $0x24] sm:$0xf]
  %v100 = vld [vmem:[%s4 + $0x28] sm:$0xf]
  %v101 = vld [vmem:[%s4 + $0x2c] sm:$0xf]
  %v102 = vld [vmem:[%s4 + $0x30] sm:$0xf]
  %v103 = vld [vmem:[%s4 + $0x34] sm:$0xf]
  %v104 = vld [vmem:[%s4 + $0x38] sm:$0xf]
  %v105 = vld [vmem:[%s4 + $0x3c] sm:$0xf]
  %v106 = vld [vmem:[%s5] sm:$0xf]
  %v107 = vld [vmem:[%s5 + $0x4] sm:$0xf]
  %v108 = vld [vmem:[%s5 + $0x8] sm:$0xf]
  %v109 = vld [vmem:[%s5 + $0xc] sm:$0xf]
  %v110 = vld [vmem:[%s5 + $0x10] sm:$0xf]
  %v111 = vld [vmem:[%s5 + $0x14] sm:$0xf]
  %v112 = vld [vmem:[%s5 + $0x18] sm:$0xf]
  %v113 = vld [vmem:[%s5 + $0x1c] sm:$0xf]
  %v114 = vld [vmem:[%s5 + $0x20] sm:$0xf]
  %v115 = vld [vmem:[%s5 + $0x24] sm:$0xf]
  %v116 = vld [vmem:[%s5 + $0x28] sm:$0xf]
  %v117 = vld [vmem:[%s5 + $0x2c] sm:$0xf]
  %v118 = vld [vmem:[%s5 + $0x30] sm:$0xf]
  %v119 = vld [vmem:[%s5 + $0x34] sm:$0xf]
  %v120 = vld [vmem:[%s5 + $0x38] sm:$0xf]
  %v121 = vld [vmem:[%s5 + $0x3c] sm:$0xf]
  %v138 = vunpack.c.l.b16 %v90
  %v139 = vunpack.c.l.b16 %v91
  %v140 = vunpack.c.l.b16 %v92
  %v141 = vunpack.c.l.b16 %v93
  %v142 = vunpack.c.l.b16 %v94
  %v143 = vunpack.c.l.b16 %v95
  %v144 = vunpack.c.l.b16 %v96
  %v145 = vunpack.c.l.b16 %v97
  %v146 = vunpack.c.l.b16 %v98
  %v147 = vunpack.c.l.b16 %v99
  %v148 = vunpack.c.l.b16 %v100
  %v149 = vunpack.c.l.b16 %v101
  %v150 = vunpack.c.l.b16 %v102
  %v151 = vunpack.c.l.b16 %v103
  %v152 = vunpack.c.l.b16 %v104
  %v153 = vunpack.c.l.b16 %v105
  %v154 = vpack.c.b16 %v139, %v138
  %v155 = vpack.c.b16 %v141, %v140
  %v156 = vpack.c.b16 %v143, %v142
  %v157 = vpack.c.b16 %v145, %v144
  %v158 = vpack.c.b16 %v147, %v146
  %v159 = vpack.c.b16 %v149, %v148
  %v160 = vpack.c.b16 %v151, %v150
  %v161 = vpack.c.b16 %v153, %v152
  %v186 = vunpack.c.l.b16 %v106
  %v187 = vunpack.c.l.b16 %v107
  %v188 = vunpack.c.l.b16 %v108
  %v189 = vunpack.c.l.b16 %v109
  %v190 = vunpack.c.l.b16 %v110
  %v191 = vunpack.c.l.b16 %v111
  %v192 = vunpack.c.l.b16 %v112
  %v193 = vunpack.c.l.b16 %v113
  %v194 = vunpack.c.l.b16 %v114
  %v195 = vunpack.c.l.b16 %v115
  %v196 = vunpack.c.l.b16 %v116
  %v197 = vunpack.c.l.b16 %v117
  %v198 = vunpack.c.l.b16 %v118
  %v199 = vunpack.c.l.b16 %v119
  %v200 = vunpack.c.l.b16 %v120
  %v201 = vunpack.c.l.b16 %v121
  %v202 = vpack.c.b16 %v187, %v186
  %v203 = vpack.c.b16 %v189, %v188
  %v204 = vpack.c.b16 %v191, %v190
  %v205 = vpack.c.b16 %v193, %v192
  %v206 = vpack.c.b16 %v195, %v194
  %v207 = vpack.c.b16 %v197, %v196
  %v208 = vpack.c.b16 %v199, %v198
  %v209 = vpack.c.b16 %v201, %v200
  %218 = vmatpush.bf16.msra.mxu0 %v209
  %219 = vmatpush.bf16.msra.mxu0 %v208
  %220 = vmatpush.bf16.msra.mxu0 %v207
  %221 = vmatpush.bf16.msra.mxu0 %v206
  %222 = vmatpush.bf16.msra.mxu0 %v205
  %223 = vmatpush.bf16.msra.mxu0 %v204
  %224 = vmatpush.bf16.msra.mxu0 %v203
  %225 = vmatpush.bf16.msra.mxu0 %v202
  %226 = vmatmul.bf16.gmra.mxu0 %v154
  %v227 = vpop.f32.mrf.mxu0
  %v228 = vadd.f32 0.0, %v227
  %v229 = vpop.f32.mrf.mxu0
  %v230 = vadd.f32 0.0, %v229
  %231 = vmatmul.bf16.gmra.mxu0 %v155
  %v232 = vpop.f32.mrf.mxu0
  %v233 = vadd.f32 0.0, %v232
  %v234 = vpop.f32.mrf.mxu0
  %v235 = vadd.f32 0.0, %v234
  %236 = vmatmul.bf16.gmra.mxu0 %v156
  %v237 = vpop.f32.mrf.mxu0
  %v238 = vadd.f32 0.0, %v237
  %v239 = vpop.f32.mrf.mxu0
  %v240 = vadd.f32 0.0, %v239
  %241 = vmatmul.bf16.gmra.mxu0 %v157
  %v242 = vpop.f32.mrf.mxu0
  %v243 = vadd.f32 0.0, %v242
  %v244 = vpop.f32.mrf.mxu0
  %v245 = vadd.f32 0.0, %v244
  %246 = vmatmul.bf16.gmra.mxu0 %v158
  %v247 = vpop.f32.mrf.mxu0
  %v248 = vadd.f32 0.0, %v247
  %v249 = vpop.f32.mrf.mxu0
  %v250 = vadd.f32 0.0, %v249
  %251 = vmatmul.bf16.gmra.mxu0 %v159
  %v252 = vpop.f32.mrf.mxu0
  %v253 = vadd.f32 0.0, %v252
  %v254 = vpop.f32.mrf.mxu0
  %v255 = vadd.f32 0.0, %v254
  %256 = vmatmul.bf16.gmra.mxu0 %v160
  %v257 = vpop.f32.mrf.mxu0
  %v258 = vadd.f32 0.0, %v257
  %v259 = vpop.f32.mrf.mxu0
  %v260 = vadd.f32 0.0, %v259
  %261 = vmatmul.bf16.gmra.mxu0 %v161
  %v262 = vpop.f32.mrf.mxu0
  %v263 = vadd.f32 0.0, %v262
  %v264 = vpop.f32.mrf.mxu0
  %v265 = vadd.f32 0.0, %v264
  %266 = vdwg.mxu0
  %v267 = vld [vmem:[%s0] sm:$0xff]
  %v268 = vld [vmem:[%s0 + $0x8] sm:$0xff]
  %v269 = vld [vmem:[%s0 + $0x10] sm:$0xff]
  %v270 = vld [vmem:[%s0 + $0x18] sm:$0xff]
  %v271 = vld [vmem:[%s0 + $0x20] sm:$0xff]
  %v272 = vld [vmem:[%s0 + $0x28] sm:$0xff]
  %v273 = vld [vmem:[%s0 + $0x30] sm:$0xff]
  %v274 = vld [vmem:[%s0 + $0x38] sm:$0xff]
  %v275 = vld [vmem:[%s0 + $0x40] sm:$0xff]
  %v276 = vld [vmem:[%s0 + $0x48] sm:$0xff]
  %v277 = vld [vmem:[%s0 + $0x50] sm:$0xff]
  %v278 = vld [vmem:[%s0 + $0x58] sm:$0xff]
  %v279 = vld [vmem:[%s0 + $0x60] sm:$0xff]
  %v280 = vld [vmem:[%s0 + $0x68] sm:$0xff]
  %v281 = vld [vmem:[%s0 + $0x70] sm:$0xff]
  %v282 = vld [vmem:[%s0 + $0x78] sm:$0xff]
  %v284 = vperm.slane %v58, 0
  %v286 = vmul.f32 %v267, %v284
  %v287 = vmul.f32 %v268, %v284
  %v288 = vmul.f32 %v269, %v284
  %v289 = vmul.f32 %v270, %v284
  %v290 = vmul.f32 %v271, %v284
  %v291 = vmul.f32 %v272, %v284
  %v292 = vmul.f32 %v273, %v284
  %v293 = vmul.f32 %v274, %v284
  %v294 = vmul.f32 %v275, %v284
  %v295 = vmul.f32 %v276, %v284
  %v296 = vmul.f32 %v277, %v284
  %v297 = vmul.f32 %v278, %v284
  %v298 = vmul.f32 %v279, %v284
  %v299 = vmul.f32 %v280, %v284
  %v300 = vmul.f32 %v281, %v284
  %v301 = vmul.f32 %v282, %v284
  %v303 = vperm.slane %v60, 0
  %v305 = vadd.f32 %v286, %v303
  %v306 = vadd.f32 %v287, %v303
  %v307 = vadd.f32 %v288, %v303
  %v308 = vadd.f32 %v289, %v303
  %v309 = vadd.f32 %v290, %v303
  %v310 = vadd.f32 %v291, %v303
  %v311 = vadd.f32 %v292, %v303
  %v312 = vadd.f32 %v293, %v303
  %v313 = vadd.f32 %v294, %v303
  %v314 = vadd.f32 %v295, %v303
  %v315 = vadd.f32 %v296, %v303
  %v316 = vadd.f32 %v297, %v303
  %v317 = vadd.f32 %v298, %v303
  %v318 = vadd.f32 %v299, %v303
  %v319 = vadd.f32 %v300, %v303
  %v320 = vadd.f32 %v301, %v303
  %v322 = vperm.slane %v87, 0
  %v324 = vmul.f32 %v228, %v322
  %v325 = vmul.f32 %v230, %v322
  %v326 = vmul.f32 %v233, %v322
  %v327 = vmul.f32 %v235, %v322
  %v328 = vmul.f32 %v238, %v322
  %v329 = vmul.f32 %v240, %v322
  %v330 = vmul.f32 %v243, %v322
  %v331 = vmul.f32 %v245, %v322
  %v332 = vmul.f32 %v248, %v322
  %v333 = vmul.f32 %v250, %v322
  %v334 = vmul.f32 %v253, %v322
  %v335 = vmul.f32 %v255, %v322
  %v336 = vmul.f32 %v258, %v322
  %v337 = vmul.f32 %v260, %v322
  %v338 = vmul.f32 %v263, %v322
  %v339 = vmul.f32 %v265, %v322
  %v341 = vperm.slane %v89, 0
  %v343 = vadd.f32 %v324, %v341
  %v344 = vadd.f32 %v325, %v341
  %v345 = vadd.f32 %v326, %v341
  %v346 = vadd.f32 %v327, %v341
  %v347 = vadd.f32 %v328, %v341
  %v348 = vadd.f32 %v329, %v341
  %v349 = vadd.f32 %v330, %v341
  %v350 = vadd.f32 %v331, %v341
  %v351 = vadd.f32 %v332, %v341
  %v352 = vadd.f32 %v333, %v341
  %v353 = vadd.f32 %v334, %v341
  %v354 = vadd.f32 %v335, %v341
  %v355 = vadd.f32 %v336, %v341
  %v356 = vadd.f32 %v337, %v341
  %v357 = vadd.f32 %v338, %v341
  %v358 = vadd.f32 %v339, %v341
  %v359 = vadd.f32 %v305, %v343
  %v360 = vadd.f32 %v306, %v344
  %v361 = vadd.f32 %v307, %v345
  %v362 = vadd.f32 %v308, %v346
  %v363 = vadd.f32 %v309, %v347
  %v364 = vadd.f32 %v310, %v348
  %v365 = vadd.f32 %v311, %v349
  %v366 = vadd.f32 %v312, %v350
  %v367 = vadd.f32 %v313, %v351
  %v368 = vadd.f32 %v314, %v352
  %v369 = vadd.f32 %v315, %v353
  %v370 = vadd.f32 %v316, %v354
  %v371 = vadd.f32 %v317, %v355
  %v372 = vadd.f32 %v318, %v356
  %v373 = vadd.f32 %v319, %v357
  %v374 = vadd.f32 %v320, %v358
  %v375 = vmax.f32 %v359, 0.0
  %v376 = vmax.f32 %v360, 0.0
  %v377 = vmax.f32 %v361, 0.0
  %v378 = vmax.f32 %v362, 0.0
  %v379 = vmax.f32 %v363, 0.0
  %v380 = vmax.f32 %v364, 0.0
  %v381 = vmax.f32 %v365, 0.0
  %v382 = vmax.f32 %v366, 0.0
  %v383 = vmax.f32 %v367, 0.0
  %v384 = vmax.f32 %v368, 0.0
  %v385 = vmax.f32 %v369, 0.0
  %v386 = vmax.f32 %v370, 0.0
  %v387 = vmax.f32 %v371, 0.0
  %v388 = vmax.f32 %v372, 0.0
  %v389 = vmax.f32 %v373, 0.0
  %v390 = vmax.f32 %v374, 0.0
  %391 = vst [vmem:[%s9] sm:$0xff] %v375
  %392 = vst [vmem:[%s9 + $0x8] sm:$0xff] %v376
  %393 = vst [vmem:[%s9 + $0x10] sm:$0xff] %v377
  %394 = vst [vmem:[%s9 + $0x18] sm:$0xff] %v378
  %395 = vst [vmem:[%s9 + $0x20] sm:$0xff] %v379
  %396 = vst [vmem:[%s9 + $0x28] sm:$0xff] %v380
  %397 = vst [vmem:[%s9 + $0x30] sm:$0xff] %v381
  %398 = vst [vmem:[%s9 + $0x38] sm:$0xff] %v382
  %399 = vst [vmem:[%s9 + $0x40] sm:$0xff] %v383
  %400 = vst [vmem:[%s9 + $0x48] sm:$0xff] %v384
  %401 = vst [vmem:[%s9 + $0x50] sm:$0xff] %v385
  %402 = vst [vmem:[%s9 + $0x58] sm:$0xff] %v386
  %403 = vst [vmem:[%s9 + $0x60] sm:$0xff] %v387
  %404 = vst [vmem:[%s9 + $0x68] sm:$0xff] %v388
  %405 = vst [vmem:[%s9 + $0x70] sm:$0xff] %v389
  %406 = vst [vmem:[%s9 + $0x78] sm:$0xff] %v390
  // Predicated region
  $region38: #{basic_block_forward.7} parent=0 // pred_check
    _
  $region39: #{basic_block_forward.7} parent=0 // pred_check_branch
    %408 = sbr.rel (0) target = $region41
  $region40: #{basic_block_forward.7} parent=0 // pred_region
    _
  $region41: #{basic_block_forward.7} parent=0 // pred_fallthru
    _
  // Predicated region
  $region42: #{basic_block_forward.7} parent=0 // pred_check
    _
  $region43: #{basic_block_forward.7} parent=0 // pred_check_branch
    %410 = sbr.rel (0) target = $region45
  $region44: #{basic_block_forward.7} parent=0 // pred_region
    _
  $region45: #{basic_block_forward.7} parent=0 // pred_fallthru
    _

// kernel: basic_block_forward.6
$region0: #{basic_block_forward.6}
  #allocation0 [shape = 'u32[]', space=smem, size = 0x4, offset = 0x4, fixed_abs, tag = 'smem constant byte address 0x4 - core index']
  #allocation1 [shape = 'u32[72,128]{1,0:T(1,128)}', space=vmem, size = 0x9000, scoped, tag = 'internal scratch']
  #allocation2 [shape = 'f32[128,128]{1,0:T(8,128)}', space=vmem, size = 0x10000, scoped, tag = 'scratch operand']
  %s0 = inlined_call_operand.vmem [shape: bf16[128,128], index: 0, kind: input, shape index: {}]
  %s1 = inlined_call_operand.vmem [shape: bf16[128,128], index: 1, kind: input, shape index: {}]
  %s2 = inlined_call_operand.vmem [shape: bf16[128,128], index: 2, kind: input, shape index: {}]
  %s3 = inlined_call_operand.vmem [shape: bf16[128,128], index: 3, kind: input, shape index: {}]
  %s4 = inlined_call_operand.vmem [shape: f32[128,128], index: 4, kind: output, shape index: {0}]
  %s5 = inlined_call_operand.vmem [shape: f32[8,128], index: 5, kind: output, shape index: {1}]
  %s6 = inlined_call_operand.vmem [shape: f32[8,128], index: 6, kind: output, shape index: {2}]
  %7 = xla_tuple %s4, %s5, %s6
  %s8 = sld [smem:[#allocation0]]
  $region50: #{basic_block_forward.6} parent=0
    _
  %s10 = ssub.s32 1, %s8
  %s11 = scalar_select 0, %s10, %s8
  // Predicated region
  $region2: #{basic_block_forward.6} parent=0 // pred_check
    _
  $region3: #{basic_block_forward.6} parent=0 // pred_check_branch
    %13 = sbr.rel (0) target = $region5
  $region4: #{basic_block_forward.6} parent=0 // pred_region
    _
  $region5: #{basic_block_forward.6} parent=0 // pred_fallthru
    _
  // Predicated region
  $region6: #{basic_block_forward.6} parent=0 // pred_check
    _
  $region7: #{basic_block_forward.6} parent=0 // pred_check_branch
    %15 = sbr.rel (0) target = $region9
  $region8: #{basic_block_forward.6} parent=0 // pred_region
    _
  $region9: #{basic_block_forward.6} parent=0 // pred_fallthru
    _
  // Predicated region
  $region10: #{basic_block_forward.6} parent=0 // pred_check
    _
  $region11: #{basic_block_forward.6} parent=0 // pred_check_branch
    %17 = sbr.rel (0) target = $region13
  $region12: #{basic_block_forward.6} parent=0 // pred_region
    _
  $region13: #{basic_block_forward.6} parent=0 // pred_fallthru
    _
  // Predicated region
  $region14: #{basic_block_forward.6} parent=0 // pred_check
    _
  $region15: #{basic_block_forward.6} parent=0 // pred_check_branch
    %19 = sbr.rel (0) target = $region17
  $region16: #{basic_block_forward.6} parent=0 // pred_region
    _
  $region17: #{basic_block_forward.6} parent=0 // pred_fallthru
    _
  %p20 = scmp.eq.s32.totalorder 0, 0
  // Predicated region
  $region18: #{basic_block_forward.6} parent=0 // pred_check
    %p21 = pneg %p20
  $region19: #{basic_block_forward.6} parent=0 // pred_check_branch
    %23 = sbr.rel (%p21) target = $region21
  $region20: #{basic_block_forward.6} parent=0 // pred_region
    %24 = vst [vmem:[#allocation2] sm:$0xff] 0.0
    %25 = vst [vmem:[#allocation2 + $0x8] sm:$0xff] 0.0
    %26 = vst [vmem:[#allocation2 + $0x10] sm:$0xff] 0.0
    %27 = vst [vmem:[#allocation2 + $0x18] sm:$0xff] 0.0
    %28 = vst [vmem:[#allocation2 + $0x20] sm:$0xff] 0.0
    %29 = vst [vmem:[#allocation2 + $0x28] sm:$0xff] 0.0
    %30 = vst [vmem:[#allocation2 + $0x30] sm:$0xff] 0.0
    %31 = vst [vmem:[#allocation2 + $0x38] sm:$0xff] 0.0
    %32 = vst [vmem:[#allocation2 + $0x40] sm:$0xff] 0.0
    %33 = vst [vmem:[#allocation2 + $0x48] sm:$0xff] 0.0
    %34 = vst [vmem:[#allocation2 + $0x50] sm:$0xff] 0.0
    %35 = vst [vmem:[#allocation2 + $0x58] sm:$0xff] 0.0
    %36 = vst [vmem:[#allocation2 + $0x60] sm:$0xff] 0.0
    %37 = vst [vmem:[#allocation2 + $0x68] sm:$0xff] 0.0
    %38 = vst [vmem:[#allocation2 + $0x70] sm:$0xff] 0.0
    %39 = vst [vmem:[#allocation2 + $0x78] sm:$0xff] 0.0
  $region21: #{basic_block_forward.6} parent=0 // pred_fallthru
    _
  %v40 = vld [vmem:[#allocation2] sm:$0xff]
  %v41 = vld [vmem:[#allocation2 + $0x8] sm:$0xff]
  %v42 = vld [vmem:[#allocation2 + $0x10] sm:$0xff]
  %v43 = vld [vmem:[#allocation2 + $0x18] sm:$0xff]
  %v44 = vld [vmem:[#allocation2 + $0x20] sm:$0xff]
  %v45 = vld [vmem:[#allocation2 + $0x28] sm:$0xff]
  %v46 = vld [vmem:[#allocation2 + $0x30] sm:$0xff]
  %v47 = vld [vmem:[#allocation2 + $0x38] sm:$0xff]
  %v48 = vld [vmem:[#allocation2 + $0x40] sm:$0xff]
  %v49 = vld [vmem:[#allocation2 + $0x48] sm:$0xff]
  %v50 = vld [vmem:[#allocation2 + $0x50] sm:$0xff]
  %v51 = vld [vmem:[#allocation2 + $0x58] sm:$0xff]
  %v52 = vld [vmem:[#allocation2 + $0x60] sm:$0xff]
  %v53 = vld [vmem:[#allocation2 + $0x68] sm:$0xff]
  %v54 = vld [vmem:[#allocation2 + $0x70] sm:$0xff]
  %v55 = vld [vmem:[#allocation2 + $0x78] sm:$0xff]
  %v56 = vld [vmem:[%s0] sm:$0xf]
  %v57 = vld [vmem:[%s0 + $0x4] sm:$0xf]
  %v58 = vld [vmem:[%s0 + $0x8] sm:$0xf]
  %v59 = vld [vmem:[%s0 + $0xc] sm:$0xf]
  %v60 = vld [vmem:[%s0 + $0x10] sm:$0xf]
  %v61 = vld [vmem:[%s0 + $0x14] sm:$0xf]
  %v62 = vld [vmem:[%s0 + $0x18] sm:$0xf]
  %v63 = vld [vmem:[%s0 + $0x1c] sm:$0xf]
  %v64 = vld [vmem:[%s0 + $0x20] sm:$0xf]
  %v65 = vld [vmem:[%s0 + $0x24] sm:$0xf]
  %v66 = vld [vmem:[%s0 + $0x28] sm:$0xf]
  %v67 = vld [vmem:[%s0 + $0x2c] sm:$0xf]
  %v68 = vld [vmem:[%s0 + $0x30] sm:$0xf]
  %v69 = vld [vmem:[%s0 + $0x34] sm:$0xf]
  %v70 = vld [vmem:[%s0 + $0x38] sm:$0xf]
  %v71 = vld [vmem:[%s0 + $0x3c] sm:$0xf]
  %v72 = vld [vmem:[%s1] sm:$0xf]
  %v73 = vld [vmem:[%s1 + $0x4] sm:$0xf]
  %v74 = vld [vmem:[%s1 + $0x8] sm:$0xf]
  %v75 = vld [vmem:[%s1 + $0xc] sm:$0xf]
  %v76 = vld [vmem:[%s1 + $0x10] sm:$0xf]
  %v77 = vld [vmem:[%s1 + $0x14] sm:$0xf]
  %v78 = vld [vmem:[%s1 + $0x18] sm:$0xf]
  %v79 = vld [vmem:[%s1 + $0x1c] sm:$0xf]
  %v80 = vld [vmem:[%s1 + $0x20] sm:$0xf]
  %v81 = vld [vmem:[%s1 + $0x24] sm:$0xf]
  %v82 = vld [vmem:[%s1 + $0x28] sm:$0xf]
  %v83 = vld [vmem:[%s1 + $0x2c] sm:$0xf]
  %v84 = vld [vmem:[%s1 + $0x30] sm:$0xf]
  %v85 = vld [vmem:[%s1 + $0x34] sm:$0xf]
  %v86 = vld [vmem:[%s1 + $0x38] sm:$0xf]
  %v87 = vld [vmem:[%s1 + $0x3c] sm:$0xf]
  %v104 = vunpack.c.l.b16 %v56
  %v105 = vunpack.c.l.b16 %v57
  %v106 = vunpack.c.l.b16 %v58
  %v107 = vunpack.c.l.b16 %v59
  %v108 = vunpack.c.l.b16 %v60
  %v109 = vunpack.c.l.b16 %v61
  %v110 = vunpack.c.l.b16 %v62
  %v111 = vunpack.c.l.b16 %v63
  %v112 = vunpack.c.l.b16 %v64
  %v113 = vunpack.c.l.b16 %v65
  %v114 = vunpack.c.l.b16 %v66
  %v115 = vunpack.c.l.b16 %v67
  %v116 = vunpack.c.l.b16 %v68
  %v117 = vunpack.c.l.b16 %v69
  %v118 = vunpack.c.l.b16 %v70
  %v119 = vunpack.c.l.b16 %v71
  %v120 = vpack.c.b16 %v105, %v104
  %v121 = vpack.c.b16 %v107, %v106
  %v122 = vpack.c.b16 %v109, %v108
  %v123 = vpack.c.b16 %v111, %v110
  %v124 = vpack.c.b16 %v113, %v112
  %v125 = vpack.c.b16 %v115, %v114
  %v126 = vpack.c.b16 %v117, %v116
  %v127 = vpack.c.b16 %v119, %v118
  %v152 = vunpack.c.l.b16 %v72
  %v153 = vunpack.c.l.b16 %v73
  %v154 = vunpack.c.l.b16 %v74
  %v155 = vunpack.c.l.b16 %v75
  %v156 = vunpack.c.l.b16 %v76
  %v157 = vunpack.c.l.b16 %v77
  %v158 = vunpack.c.l.b16 %v78
  %v159 = vunpack.c.l.b16 %v79
  %v160 = vunpack.c.l.b16 %v80
  %v161 = vunpack.c.l.b16 %v81
  %v162 = vunpack.c.l.b16 %v82
  %v163 = vunpack.c.l.b16 %v83
  %v164 = vunpack.c.l.b16 %v84
  %v165 = vunpack.c.l.b16 %v85
  %v166 = vunpack.c.l.b16 %v86
  %v167 = vunpack.c.l.b16 %v87
  %v168 = vpack.c.b16 %v153, %v152
  %v169 = vpack.c.b16 %v155, %v154
  %v170 = vpack.c.b16 %v157, %v156
  %v171 = vpack.c.b16 %v159, %v158
  %v172 = vpack.c.b16 %v161, %v160
  %v173 = vpack.c.b16 %v163, %v162
  %v174 = vpack.c.b16 %v165, %v164
  %v175 = vpack.c.b16 %v167, %v166
  %184 = vmatpush.bf16.msra.mxu0 %v175
  %185 = vmatpush.bf16.msra.mxu0 %v174
  %186 = vmatpush.bf16.msra.mxu0 %v173
  %187 = vmatpush.bf16.msra.mxu0 %v172
  %188 = vmatpush.bf16.msra.mxu0 %v171
  %189 = vmatpush.bf16.msra.mxu0 %v170
  %190 = vmatpush.bf16.msra.mxu0 %v169
  %191 = vmatpush.bf16.msra.mxu0 %v168
  %192 = vmatmul.bf16.gmra.mxu0 %v120
  %v193 = vpop.f32.mrf.mxu0
  %v194 = vadd.f32 0.0, %v193
  %v195 = vpop.f32.mrf.mxu0
  %v196 = vadd.f32 0.0, %v195
  %197 = vmatmul.bf16.gmra.mxu0 %v121
  %v198 = vpop.f32.mrf.mxu0
  %v199 = vadd.f32 0.0, %v198
  %v200 = vpop.f32.mrf.mxu0
  %v201 = vadd.f32 0.0, %v200
  %202 = vmatmul.bf16.gmra.mxu0 %v122
  %v203 = vpop.f32.mrf.mxu0
  %v204 = vadd.f32 0.0, %v203
  %v205 = vpop.f32.mrf.mxu0
  %v206 = vadd.f32 0.0, %v205
  %207 = vmatmul.bf16.gmra.mxu0 %v123
  %v208 = vpop.f32.mrf.mxu0
  %v209 = vadd.f32 0.0, %v208
  %v210 = vpop.f32.mrf.mxu0
  %v211 = vadd.f32 0.0, %v210
  %212 = vmatmul.bf16.gmra.mxu0 %v124
  %v213 = vpop.f32.mrf.mxu0
  %v214 = vadd.f32 0.0, %v213
  %v215 = vpop.f32.mrf.mxu0
  %v216 = vadd.f32 0.0, %v215
  %217 = vmatmul.bf16.gmra.mxu0 %v125
  %v218 = vpop.f32.mrf.mxu0
  %v219 = vadd.f32 0.0, %v218
  %v220 = vpop.f32.mrf.mxu0
  %v221 = vadd.f32 0.0, %v220
  %222 = vmatmul.bf16.gmra.mxu0 %v126
  %v223 = vpop.f32.mrf.mxu0
  %v224 = vadd.f32 0.0, %v223
  %v225 = vpop.f32.mrf.mxu0
  %v226 = vadd.f32 0.0, %v225
  %227 = vmatmul.bf16.gmra.mxu0 %v127
  %v228 = vpop.f32.mrf.mxu0
  %v229 = vadd.f32 0.0, %v228
  %v230 = vpop.f32.mrf.mxu0
  %v231 = vadd.f32 0.0, %v230
  %232 = vdwg.mxu0
  %v233 = vadd.f32 %v40, %v194
  %v234 = vadd.f32 %v41, %v196
  %v235 = vadd.f32 %v42, %v199
  %v236 = vadd.f32 %v43, %v201
  %v237 = vadd.f32 %v44, %v204
  %v238 = vadd.f32 %v45, %v206
  %v239 = vadd.f32 %v46, %v209
  %v240 = vadd.f32 %v47, %v211
  %v241 = vadd.f32 %v48, %v214
  %v242 = vadd.f32 %v49, %v216
  %v243 = vadd.f32 %v50, %v219
  %v244 = vadd.f32 %v51, %v221
  %v245 = vadd.f32 %v52, %v224
  %v246 = vadd.f32 %v53, %v226
  %v247 = vadd.f32 %v54, %v229
  %v248 = vadd.f32 %v55, %v231
  %249 = vst [vmem:[#allocation2] sm:$0xff] %v233
  %250 = vst [vmem:[#allocation2 + $0x8] sm:$0xff] %v234
  %251 = vst [vmem:[#allocation2 + $0x10] sm:$0xff] %v235
  %252 = vst [vmem:[#allocation2 + $0x18] sm:$0xff] %v236
  %253 = vst [vmem:[#allocation2 + $0x20] sm:$0xff] %v237
  %254 = vst [vmem:[#allocation2 + $0x28] sm:$0xff] %v238
  %255 = vst [vmem:[#allocation2 + $0x30] sm:$0xff] %v239
  %256 = vst [vmem:[#allocation2 + $0x38] sm:$0xff] %v240
  %257 = vst [vmem:[#allocation2 + $0x40] sm:$0xff] %v241
  %258 = vst [vmem:[#allocation2 + $0x48] sm:$0xff] %v242
  %259 = vst [vmem:[#allocation2 + $0x50] sm:$0xff] %v243
  %260 = vst [vmem:[#allocation2 + $0x58] sm:$0xff] %v244
  %261 = vst [vmem:[#allocation2 + $0x60] sm:$0xff] %v245
  %262 = vst [vmem:[#allocation2 + $0x68] sm:$0xff] %v246
  %263 = vst [vmem:[#allocation2 + $0x70] sm:$0xff] %v247
  %264 = vst [vmem:[#allocation2 + $0x78] sm:$0xff] %v248
  // Predicated region
  $region22: #{basic_block_forward.6} parent=0 // pred_check
    %p265 = pneg %p20
  $region23: #{basic_block_forward.6} parent=0 // pred_check_branch
    %267 = sbr.rel (%p265) target = $region25
  $region24: #{basic_block_forward.6} parent=0 // pred_region
    %v268 = vld [vmem:[#allocation2] sm:$0xff]
    %v269 = vld [vmem:[#allocation2 + $0x8] sm:$0xff]
    %v270 = vld [vmem:[#allocation2 + $0x10] sm:$0xff]
    %v271 = vld [vmem:[#allocation2 + $0x18] sm:$0xff]
    %v272 = vld [vmem:[#allocation2 + $0x20] sm:$0xff]
    %v273 = vld [vmem:[#allocation2 + $0x28] sm:$0xff]
    %v274 = vld [vmem:[#allocation2 + $0x30] sm:$0xff]
    %v275 = vld [vmem:[#allocation2 + $0x38] sm:$0xff]
    %v276 = vld [vmem:[#allocation2 + $0x40] sm:$0xff]
    %v277 = vld [vmem:[#allocation2 + $0x48] sm:$0xff]
    %v278 = vld [vmem:[#allocation2 + $0x50] sm:$0xff]
    %v279 = vld [vmem:[#allocation2 + $0x58] sm:$0xff]
    %v280 = vld [vmem:[#allocation2 + $0x60] sm:$0xff]
    %v281 = vld [vmem:[#allocation2 + $0x68] sm:$0xff]
    %v282 = vld [vmem:[#allocation2 + $0x70] sm:$0xff]
    %v283 = vld [vmem:[#allocation2 + $0x78] sm:$0xff]
    %284 = vst [vmem:[%s4] sm:$0xff] %v268
    %285 = vst [vmem:[%s4 + $0x8] sm:$0xff] %v269
    %286 = vst [vmem:[%s4 + $0x10] sm:$0xff] %v270
    %287 = vst [vmem:[%s4 + $0x18] sm:$0xff] %v271
    %288 = vst [vmem:[%s4 + $0x20] sm:$0xff] %v272
    %289 = vst [vmem:[%s4 + $0x28] sm:$0xff] %v273
    %290 = vst [vmem:[%s4 + $0x30] sm:$0xff] %v274
    %291 = vst [vmem:[%s4 + $0x38] sm:$0xff] %v275
    %292 = vst [vmem:[%s4 + $0x40] sm:$0xff] %v276
    %293 = vst [vmem:[%s4 + $0x48] sm:$0xff] %v277
    %294 = vst [vmem:[%s4 + $0x50] sm:$0xff] %v278
    %295 = vst [vmem:[%s4 + $0x58] sm:$0xff] %v279
    %296 = vst [vmem:[%s4 + $0x60] sm:$0xff] %v280
    %297 = vst [vmem:[%s4 + $0x68] sm:$0xff] %v281
    %298 = vst [vmem:[%s4 + $0x70] sm:$0xff] %v282
    %299 = vst [vmem:[%s4 + $0x78] sm:$0xff] %v283
    %v300 = vadd.f32 %v268, %v269
    %v301 = vadd.f32 %v300, %v270
    %v302 = vadd.f32 %v301, %v271
    %v303 = vadd.f32 %v302, %v272
    %v304 = vadd.f32 %v303, %v273
    %v305 = vadd.f32 %v304, %v274
    %v306 = vadd.f32 %v305, %v275
    %v307 = vadd.f32 %v306, %v276
    %v308 = vadd.f32 %v307, %v277
    %v309 = vadd.f32 %v308, %v278
    %v310 = vadd.f32 %v309, %v279
    %v311 = vadd.f32 %v310, %v280
    %v312 = vadd.f32 %v311, %v281
    %v313 = vadd.f32 %v312, %v282
    %v314 = vadd.f32 %v313, %v283
    %v315 = vrot.slane %v314, 4
    %v316 = vadd.f32 %v314, %v315
    %v317 = vrot.slane %v316, 2
    %v318 = vadd.f32 %v316, %v317
    %v319 = vrot.slane %v318, 1
    %v320 = vadd.f32 %v318, %v319
    %v321 = vmul.f32 %v268, %v268
    %v322 = vmul.f32 %v269, %v269
    %v323 = vmul.f32 %v270, %v270
    %v324 = vmul.f32 %v271, %v271
    %v325 = vmul.f32 %v272, %v272
    %v326 = vmul.f32 %v273, %v273
    %v327 = vmul.f32 %v274, %v274
    %v328 = vmul.f32 %v275, %v275
    %v329 = vmul.f32 %v276, %v276
    %v330 = vmul.f32 %v277, %v277
    %v331 = vmul.f32 %v278, %v278
    %v332 = vmul.f32 %v279, %v279
    %v333 = vmul.f32 %v280, %v280
    %v334 = vmul.f32 %v281, %v281
    %v335 = vmul.f32 %v282, %v282
    %v336 = vmul.f32 %v283, %v283
    %v337 = vadd.f32 %v321, %v322
    %v338 = vadd.f32 %v337, %v323
    %v339 = vadd.f32 %v338, %v324
    %v340 = vadd.f32 %v339, %v325
    %v341 = vadd.f32 %v340, %v326
    %v342 = vadd.f32 %v341, %v327
    %v343 = vadd.f32 %v342, %v328
    %v344 = vadd.f32 %v343, %v329
    %v345 = vadd.f32 %v344, %v330
    %v346 = vadd.f32 %v345, %v331
    %v347 = vadd.f32 %v346, %v332
    %v348 = vadd.f32 %v347, %v333
    %v349 = vadd.f32 %v348, %v334
    %v350 = vadd.f32 %v349, %v335
    %v351 = vadd.f32 %v350, %v336
    %v352 = vrot.slane %v351, 4
    %v353 = vadd.f32 %v351, %v352
    %v354 = vrot.slane %v353, 2
    %v355 = vadd.f32 %v353, %v354
    %v356 = vrot.slane %v355, 1
    %v357 = vadd.f32 %v355, %v356
    %vm358 = vcmask 1040384
    %v359 = vsel %vm358, %v320, %v357
    %vm360 = vcmask 1041408
    %v361 = vsel %vm360, %v359, 0.0
    %362 = vst [vmem:[%s5] sm:$0xff] %v361
    %v363 = vld [vmem:[%s2] sm:$0xf]
    %v364 = vld [vmem:[%s2 + $0x4] sm:$0xf]
    %v365 = vld [vmem:[%s2 + $0x8] sm:$0xf]
    %v366 = vld [vmem:[%s2 + $0xc] sm:$0xf]
    %v367 = vld [vmem:[%s2 + $0x10] sm:$0xf]
    %v368 = vld [vmem:[%s2 + $0x14] sm:$0xf]
    %v369 = vld [vmem:[%s2 + $0x18] sm:$0xf]
    %v370 = vld [vmem:[%s2 + $0x1c] sm:$0xf]
    %v371 = vld [vmem:[%s2 + $0x20] sm:$0xf]
    %v372 = vld [vmem:[%s2 + $0x24] sm:$0xf]
    %v373 = vld [vmem:[%s2 + $0x28] sm:$0xf]
    %v374 = vld [vmem:[%s2 + $0x2c] sm:$0xf]
    %v375 = vld [vmem:[%s2 + $0x30] sm:$0xf]
    %v376 = vld [vmem:[%s2 + $0x34] sm:$0xf]
    %v377 = vld [vmem:[%s2 + $0x38] sm:$0xf]
    %v378 = vld [vmem:[%s2 + $0x3c] sm:$0xf]
    %v379 = vld [vmem:[%s3] sm:$0xf]
    %v380 = vld [vmem:[%s3 + $0x4] sm:$0xf]
    %v381 = vld [vmem:[%s3 + $0x8] sm:$0xf]
    %v382 = vld [vmem:[%s3 + $0xc] sm:$0xf]
    %v383 = vld [vmem:[%s3 + $0x10] sm:$0xf]
    %v384 = vld [vmem:[%s3 + $0x14] sm:$0xf]
    %v385 = vld [vmem:[%s3 + $0x18] sm:$0xf]
    %v386 = vld [vmem:[%s3 + $0x1c] sm:$0xf]
    %v387 = vld [vmem:[%s3 + $0x20] sm:$0xf]
    %v388 = vld [vmem:[%s3 + $0x24] sm:$0xf]
    %v389 = vld [vmem:[%s3 + $0x28] sm:$0xf]
    %v390 = vld [vmem:[%s3 + $0x2c] sm:$0xf]
    %v391 = vld [vmem:[%s3 + $0x30] sm:$0xf]
    %v392 = vld [vmem:[%s3 + $0x34] sm:$0xf]
    %v393 = vld [vmem:[%s3 + $0x38] sm:$0xf]
    %v394 = vld [vmem:[%s3 + $0x3c] sm:$0xf]
    %v411 = vunpack.c.l.b16 %v363
    %v412 = vunpack.c.l.b16 %v364
    %v413 = vunpack.c.l.b16 %v365
    %v414 = vunpack.c.l.b16 %v366
    %v415 = vunpack.c.l.b16 %v367
    %v416 = vunpack.c.l.b16 %v368
    %v417 = vunpack.c.l.b16 %v369
    %v418 = vunpack.c.l.b16 %v370
    %v419 = vunpack.c.l.b16 %v371
    %v420 = vunpack.c.l.b16 %v372
    %v421 = vunpack.c.l.b16 %v373
    %v422 = vunpack.c.l.b16 %v374
    %v423 = vunpack.c.l.b16 %v375
    %v424 = vunpack.c.l.b16 %v376
    %v425 = vunpack.c.l.b16 %v377
    %v426 = vunpack.c.l.b16 %v378
    %v427 = vpack.c.b16 %v412, %v411
    %v428 = vpack.c.b16 %v414, %v413
    %v429 = vpack.c.b16 %v416, %v415
    %v430 = vpack.c.b16 %v418, %v417
    %v431 = vpack.c.b16 %v420, %v419
    %v432 = vpack.c.b16 %v422, %v421
    %v433 = vpack.c.b16 %v424, %v423
    %v434 = vpack.c.b16 %v426, %v425
    %v459 = vunpack.c.l.b16 %v379
    %v460 = vunpack.c.l.b16 %v380
    %v461 = vunpack.c.l.b16 %v381
    %v462 = vunpack.c.l.b16 %v382
    %v463 = vunpack.c.l.b16 %v383
    %v464 = vunpack.c.l.b16 %v384
    %v465 = vunpack.c.l.b16 %v385
    %v466 = vunpack.c.l.b16 %v386
    %v467 = vunpack.c.l.b16 %v387
    %v468 = vunpack.c.l.b16 %v388
    %v469 = vunpack.c.l.b16 %v389
    %v470 = vunpack.c.l.b16 %v390
    %v471 = vunpack.c.l.b16 %v391
    %v472 = vunpack.c.l.b16 %v392
    %v473 = vunpack.c.l.b16 %v393
    %v474 = vunpack.c.l.b16 %v394
    %v475 = vpack.c.b16 %v460, %v459
    %v476 = vpack.c.b16 %v462, %v461
    %v477 = vpack.c.b16 %v464, %v463
    %v478 = vpack.c.b16 %v466, %v465
    %v479 = vpack.c.b16 %v468, %v467
    %v480 = vpack.c.b16 %v470, %v469
    %v481 = vpack.c.b16 %v472, %v471
    %v482 = vpack.c.b16 %v474, %v473
    %491 = vmatpush.bf16.msra.mxu0 %v482
    %492 = vmatpush.bf16.msra.mxu0 %v481
    %493 = vmatpush.bf16.msra.mxu0 %v480
    %494 = vmatpush.bf16.msra.mxu0 %v479
    %495 = vmatpush.bf16.msra.mxu0 %v478
    %496 = vmatpush.bf16.msra.mxu0 %v477
    %497 = vmatpush.bf16.msra.mxu0 %v476
    %498 = vmatpush.bf16.msra.mxu0 %v475
    %499 = vmatmul.bf16.gmra.mxu0 %v427
    %v500 = vpop.f32.mrf.mxu0
    %v501 = vadd.f32 0.0, %v500
    %v502 = vpop.f32.mrf.mxu0
    %v503 = vadd.f32 0.0, %v502
    %504 = vmatmul.bf16.gmra.mxu0 %v428
    %v505 = vpop.f32.mrf.mxu0
    %v506 = vadd.f32 0.0, %v505
    %v507 = vpop.f32.mrf.mxu0
    %v508 = vadd.f32 0.0, %v507
    %509 = vmatmul.bf16.gmra.mxu0 %v429
    %v510 = vpop.f32.mrf.mxu0
    %v511 = vadd.f32 0.0, %v510
    %v512 = vpop.f32.mrf.mxu0
    %v513 = vadd.f32 0.0, %v512
    %514 = vmatmul.bf16.gmra.mxu0 %v430
    %v515 = vpop.f32.mrf.mxu0
    %v516 = vadd.f32 0.0, %v515
    %v517 = vpop.f32.mrf.mxu0
    %v518 = vadd.f32 0.0, %v517
    %519 = vmatmul.bf16.gmra.mxu0 %v431
    %v520 = vpop.f32.mrf.mxu0
    %v521 = vadd.f32 0.0, %v520
    %v522 = vpop.f32.mrf.mxu0
    %v523 = vadd.f32 0.0, %v522
    %524 = vmatmul.bf16.gmra.mxu0 %v432
    %v525 = vpop.f32.mrf.mxu0
    %v526 = vadd.f32 0.0, %v525
    %v527 = vpop.f32.mrf.mxu0
    %v528 = vadd.f32 0.0, %v527
    %529 = vmatmul.bf16.gmra.mxu0 %v433
    %v530 = vpop.f32.mrf.mxu0
    %v531 = vadd.f32 0.0, %v530
    %v532 = vpop.f32.mrf.mxu0
    %v533 = vadd.f32 0.0, %v532
    %534 = vmatmul.bf16.gmra.mxu0 %v434
    %v535 = vpop.f32.mrf.mxu0
    %v536 = vadd.f32 0.0, %v535
    %v537 = vpop.f32.mrf.mxu0
    %v538 = vadd.f32 0.0, %v537
    %539 = vdwg.mxu0
    %v540 = vadd.f32 %v501, %v503
    %v541 = vadd.f32 %v540, %v506
    %v542 = vadd.f32 %v541, %v508
    %v543 = vadd.f32 %v542, %v511
    %v544 = vadd.f32 %v543, %v513
    %v545 = vadd.f32 %v544, %v516
    %v546 = vadd.f32 %v545, %v518
    %v547 = vadd.f32 %v546, %v521
    %v548 = vadd.f32 %v547, %v523
    %v549 = vadd.f32 %v548, %v526
    %v550 = vadd.f32 %v549, %v528
    %v551 = vadd.f32 %v550, %v531
    %v552 = vadd.f32 %v551, %v533
    %v553 = vadd.f32 %v552, %v536
    %v554 = vadd.f32 %v553, %v538
    %v555 = vrot.slane %v554, 4
    %v556 = vadd.f32 %v554, %v555
    %v557 = vrot.slane %v556, 2
    %v558 = vadd.f32 %v556, %v557
    %v559 = vrot.slane %v558, 1
    %v560 = vadd.f32 %v558, %v559
    %v561 = vmul.f32 %v501, %v501
    %v562 = vmul.f32 %v503, %v503
    %v563 = vmul.f32 %v506, %v506
    %v564 = vmul.f32 %v508, %v508
    %v565 = vmul.f32 %v511, %v511
    %v566 = vmul.f32 %v513, %v513
    %v567 = vmul.f32 %v516, %v516
    %v568 = vmul.f32 %v518, %v518
    %v569 = vmul.f32 %v521, %v521
    %v570 = vmul.f32 %v523, %v523
    %v571 = vmul.f32 %v526, %v526
    %v572 = vmul.f32 %v528, %v528
    %v573 = vmul.f32 %v531, %v531
    %v574 = vmul.f32 %v533, %v533
    %v575 = vmul.f32 %v536, %v536
    %v576 = vmul.f32 %v538, %v538
    %v577 = vadd.f32 %v561, %v562
    %v578 = vadd.f32 %v577, %v563
    %v579 = vadd.f32 %v578, %v564
    %v580 = vadd.f32 %v579, %v565
    %v581 = vadd.f32 %v580, %v566
    %v582 = vadd.f32 %v581, %v567
    %v583 = vadd.f32 %v582, %v568
    %v584 = vadd.f32 %v583, %v569
    %v585 = vadd.f32 %v584, %v570
    %v586 = vadd.f32 %v585, %v571
    %v587 = vadd.f32 %v586, %v572
    %v588 = vadd.f32 %v587, %v573
    %v589 = vadd.f32 %v588, %v574
    %v590 = vadd.f32 %v589, %v575
    %v591 = vadd.f32 %v590, %v576
    %v592 = vrot.slane %v591, 4
    %v593 = vadd.f32 %v591, %v592
    %v594 = vrot.slane %v593, 2
    %v595 = vadd.f32 %v593, %v594
    %v596 = vrot.slane %v595, 1
    %v597 = vadd.f32 %v595, %v596
    %v598 = vsel %vm358, %v560, %v597
    %v599 = vsel %vm360, %v598, 0.0
    %600 = vst [vmem:[%s6] sm:$0xff] %v599
  $region25: #{basic_block_forward.6} parent=0 // pred_fallthru
    _
  // Predicated region
  $region26: #{basic_block_forward.6} parent=0 // pred_check
    _
  $region27: #{basic_block_forward.6} parent=0 // pred_check_branch
    %602 = sbr.rel (0) target = $region29
  $region28: #{basic_block_forward.6} parent=0 // pred_region
    _
  $region29: #{basic_block_forward.6} parent=0 // pred_fallthru
    _
  // Predicated region
  $region30: #{basic_block_forward.6} parent=0 // pred_check
    _
  $region31: #{basic_block_forward.6} parent=0 // pred_check_branch
    %604 = sbr.rel (0) target = $region33
  $region32: #{basic_block_forward.6} parent=0 // pred_region
    _
  $region33: #{basic_block_forward.6} parent=0 // pred_fallthru
    _
  // Predicated region
  $region34: #{basic_block_forward.6} parent=0 // pred_check
    _
  $region35: #{basic_block_forward.6} parent=0 // pred_check_branch
    %606 = sbr.rel (0) target = $region37
  $region36: #{basic_block_forward.6} parent=0 // pred_region
    _
  $region37: #{basic_block_forward.6} parent=0 // pred_fallthru
    _
  // Predicated region
  $region38: #{basic_block_forward.6} parent=0 // pred_check
    _
  $region39: #{basic_block_forward.6} parent=0 // pred_check_branch
    %608 = sbr.rel (0) target = $region41
  $region40: #{basic_block_forward.6} parent=0 // pred_region
    _
  $region41: #{basic_block_forward.6} parent=0 // pred_fallthru
    _
  // Predicated region
  $region42: #{basic_block_forward.6} parent=0 // pred_check
    _
  $region43: #{basic_block_forward.6} parent=0 // pred_check_branch
    %610 = sbr.rel (0) target = $region45
  $region44: #{basic_block_forward.6} parent=0 // pred_region
    _
  $region45: #{basic_block_forward.6} parent=0 // pred_fallthru
    _
  // Predicated region
  $region46: #{basic_block_forward.6} parent=0 // pred_check
    _
  $region47: #{basic_block_forward.6} parent=0 // pred_check_branch
    %612 = sbr.rel (0) target = $region49
  $region48: #{basic_block_forward.6} parent=0 // pred_region
    _
  $region49: #{basic_block_forward.6} parent=0 // pred_fallthru
    _

</llo_original>
